<compile_context>
chip_gen: v6e
topology: v6e:2x2x1
jax: 0.10.0
libtpu: 0.0.40
codegen_flags: <defaults>
</compile_context>

<pallas_src>
import jax
import jax.numpy as jnp
from jax import lax
from jax.experimental import pallas as pl
from jax.experimental.pallas import tpu as pltpu

BN_EPS = 1e-5
LANE = 128


def _critic_kernel(state_ref, action_ref,
                   w1_ref, b1_ref, gamma_ref, beta_ref,
                   w2p_ref, b2_ref, w3_ref, b3_ref,
                   q_ref, cat_ref):
    """One full critic forward for one (state, action) minibatch.

    Shapes seen by the kernel (leading grid dim squeezed away):
      state  (B, S)  f32       action (B, A) f32
      w1     (S, F1) f32       b1/gamma/beta (1, F1) f32
      w2p    (F1+AP, F2) bf16  b2 (1, F2) f32
      w3     (1, F2) f32       b3 (1, 1)  f32
      q_ref  (B, 1)  f32       cat_ref (B, F1+AP) bf16 scratch
    """
    B = state_ref.shape[0]
    A = action_ref.shape[1]
    F1 = w1_ref.shape[1]
    AP = cat_ref.shape[1] - F1

    # ---- fcs1: h1 = state @ W1 + b1.  Kept f32 end-to-end: K is tiny and
    # bf16-rounded inputs feeding the BatchNorm rsqrt would amplify error.
    h1 = jnp.dot(state_ref[...], w1_ref[...],
                 preferred_element_type=jnp.float32) + b1_ref[...]

    # ---- BatchNorm1d (training mode, biased batch var), two-pass centered
    # form; gamma folded into a single per-feature scale row.
    mean = jnp.mean(h1, axis=0, keepdims=True)              # (1, F1)
    centered = h1 - mean
    var = jnp.mean(centered * centered, axis=0, keepdims=True)
    scale = gamma_ref[...] * lax.rsqrt(var + BN_EPS)
    xs = jnp.maximum(centered * scale + beta_ref[...], 0.0)  # ReLU, f32

    # ---- Fused concat: xs | action | zero-pad into the bf16 scratch.
    # xs is exactly F1 (=128) lanes wide -> unmasked lane-aligned store.
    # The action half is re-zeroed every step (the scratch persists across
    # grid steps and may live on either TensorCore, so no "zero once" trick).
    cat_ref[:, :F1] = xs.astype(jnp.bfloat16)
    cat_ref[:, F1:] = jnp.zeros((B, AP), jnp.bfloat16)
    cat_ref[:, F1:F1 + A] = action_ref[...].astype(jnp.bfloat16)

    # ---- fc2: ONE K = F1+AP (=256) bf16 x bf16 -> f32 MXU contraction in the
    # standard orientation (no transposed dot_general, no XLU transpose risk).
    h2 = jnp.dot(cat_ref[...], w2p_ref[...],
                 preferred_element_type=jnp.float32) + b2_ref[...]
    h2 = jnp.maximum(h2, 0.0)                                # (B, F2) f32

    # ---- fc3 -> Q: VPU multiply + lane (XLU) reduction; no degenerate N=1
    # matmul.  (B, 1) is written directly so the wrapper needs no reshape HLO.
    q_ref[...] = (jnp.sum(h2 * w3_ref[...], axis=1, keepdims=True)
                  + b3_ref[...])


def critic_forward(states, actions, params):
    """Evaluates G independent critic forwards in ONE pallas_call.

    states:  (G, B, S) or (B, S)    actions: (G, B, A) or (B, A)
    returns: (G, B, 1) or (B, 1)

    Batching several minibatches per call (e.g. local + target critic inputs
    in a DDPG update) amortizes launch/DMA latency; the grid axis is
    "parallel" so v7x can spread the forwards over its two TensorCores.
    """
    squeeze = states.ndim == 2
    if squeeze:
        states, actions = states[None], actions[None]
    G, B, S = states.shape
    A = actions.shape[-1]
    K2 = params["w2p"].shape[0]          # F1 + lane-padded action width

    weight_args = (params["w1"], params["b1"], params["gamma"], params["beta"],
                   params["w2p"], params["b2"], params["w3"], params["b3"])
    vmem_full = pl.BlockSpec(memory_space=pltpu.MemorySpace.VMEM)

    out = pl.pallas_call(
        _critic_kernel,
        out_shape=jax.ShapeDtypeStruct((G, B, 1), jnp.float32),
        grid=(G,),
        in_specs=[pl.BlockSpec((None, B, S), lambda g: (g, 0, 0)),
                  pl.BlockSpec((None, B, A), lambda g: (g, 0, 0))]
                 + [vmem_full] * len(weight_args),
        out_specs=pl.BlockSpec((None, B, 1), lambda g: (g, 0, 0)),
        scratch_shapes=[pltpu.VMEM((B, K2), jnp.bfloat16)],
        compiler_params=pltpu.CompilerParams(
            dimension_semantics=("parallel",)),
    )(states, actions, *weight_args)
    return out[0] if squeeze else out


def init_params(key, state_size, action_size, fcs1_units, fc2_units):
    """Deterministic init mirroring Critic.reset_parameters().

    NOTE: hidden_init uses weight.size()[0] == out_features as "fan_in",
    reproducing the original module's quirk.  Biases keep the default
    nn.Linear init (uniform over +/- 1/sqrt(in_features)).
    Kernel-side layouts:
      w1  (state, fcs1)  f32  == fcs1.weight.T
      w2p (fcs1+AP, fc2) bf16 == [fc2.weight[:, :fcs1] | fc2.weight[:, fcs1:] | 0].T
      b1/gamma/beta/b2/w3 as (1, features) rows, b3 (1, 1)     (all f32)
    """
    k1, k1b, k2, k2b, k3, k3b = jax.random.split(key, 6)

    lim1 = 1.0 / (fcs1_units ** 0.5)
    lim2 = 1.0 / (fc2_units ** 0.5)
    fan1 = 1.0 / (state_size ** 0.5)
    fan2 = 1.0 / ((fcs1_units + action_size) ** 0.5)
    fan3 = 1.0 / (fc2_units ** 0.5)

    w1 = jax.random.uniform(k1, (state_size, fcs1_units), jnp.float32, -lim1, lim1)
    b1 = jax.random.uniform(k1b, (1, fcs1_units), jnp.float32, -fan1, fan1)

    w2 = jax.random.uniform(k2, (fc2_units, fcs1_units + action_size),
                            jnp.float32, -lim2, lim2)
    b2 = jax.random.uniform(k2b, (1, fc2_units), jnp.float32, -fan2, fan2)

    w3 = jax.random.uniform(k3, (1, fc2_units), jnp.float32, -3e-3, 3e-3)
    b3 = jax.random.uniform(k3b, (1, 1), jnp.float32, -fan3, fan3)

    # Pack fc2's weight for the fused-concat K=256 matmul.
    a_pad = max(LANE, ((action_size + LANE - 1) // LANE) * LANE)
    w2p = jnp.zeros((fcs1_units + a_pad, fc2_units), jnp.float32)
    w2p = w2p.at[:fcs1_units + action_size].set(w2.T)

    return {
        "w1": w1,                                   # f32 (tiny; keeps BN exact)
        "b1": b1,
        "gamma": jnp.ones((1, fcs1_units), jnp.float32),   # BatchNorm1d weight
        "beta": jnp.zeros((1, fcs1_units), jnp.float32),   # BatchNorm1d bias
        "w2p": w2p.astype(jnp.bfloat16),            # bf16: native MXU operand
        "b2": b2,
        "w3": w3, "b3": b3,
    }


def critic_reference(state, action, p):
    """Pure-JAX reference following the PyTorch module's forward literally."""
    F1 = p["w1"].shape[1]
    A = action.shape[1]
    h1 = state @ p["w1"] + p["b1"]
    mean = h1.mean(0, keepdims=True)
    var = ((h1 - mean) ** 2).mean(0, keepdims=True)
    xs = jax.nn.relu((h1 - mean) / jnp.sqrt(var + BN_EPS) * p["gamma"] + p["beta"])
    x = jnp.concatenate([xs, action], axis=1)
    w2 = p["w2p"].astype(jnp.float32)[:F1 + A]       # (F1+A, F2) unpadded
    h2 = jax.nn.relu(x @ w2 + p["b2"])
    return h2 @ p["w3"].T + p["b3"]


if __name__ == "__main__":
    # Two independent DDPG minibatches (e.g. the two critic evaluations of one
    # update step) per pallas_call; 256-row batches fill the MXU rows and the
    # 128-wide hiddens are lane-aligned — still tiny in absolute terms.
    G, B, STATE, ACTION = 2, 256, 32, 8
    FCS1, FC2 = 128, 128

    key = jax.random.PRNGKey(0)
    k_s, k_a, k_p = jax.random.split(key, 3)
    states = jax.random.normal(k_s, (G, B, STATE), jnp.float32)
    actions = jax.random.normal(k_a, (G, B, ACTION), jnp.float32)
    params = init_params(k_p, STATE, ACTION, FCS1, FC2)

    critic = jax.jit(critic_forward)
    q = jax.block_until_ready(critic(states, actions, params))
    assert q.shape == (G, B, 1)

    q_ref = jnp.stack([critic_reference(states[g], actions[g], params)
                       for g in range(G)])
    max_err = float(jnp.max(jnp.abs(q - q_ref)))
    # bf16 is only used for the fc2 matmul operands (f32 accumulation), and the
    # tiny fc3 weights shrink that error further; 2e-3 abs is a safe bound.
    assert jnp.allclose(q, q_ref, atol=2e-3, rtol=2e-3), max_err

    print("KERNEL_OK")
</pallas_src>

<mosaic_0001>
module attributes {stable_mosaic.version = 11 : i64} {
  func.func @_critic_kernel(%arg0: i32, %arg1: memref<1x256x32xf32, #tpu.memory_space<vmem>>, %arg2: memref<1x256x8xf32, #tpu.memory_space<vmem>>, %arg3: memref<32x128xf32, #tpu.memory_space<vmem>>, %arg4: memref<1x128xf32, #tpu.memory_space<vmem>>, %arg5: memref<1x128xf32, #tpu.memory_space<vmem>>, %arg6: memref<1x128xf32, #tpu.memory_space<vmem>>, %arg7: memref<256x128xbf16, #tpu.memory_space<vmem>>, %arg8: memref<1x128xf32, #tpu.memory_space<vmem>>, %arg9: memref<1x128xf32, #tpu.memory_space<vmem>>, %arg10: memref<1x1xf32, #tpu.memory_space<vmem>>, %arg11: memref<1x256x1xf32, #tpu.memory_space<vmem>>, %arg12: memref<256x256xbf16, #tpu.memory_space<vmem>>) attributes {dimension_semantics = [#tpu.dimension_semantics<parallel>], iteration_bounds = array<i64: 2>, scalar_prefetch = 0 : i64, scratch_operands = 1 : i64, tpu.core_type = #tpu.core_type<tc>, window_params = [{transform_indices = @transform_0, window_bounds = array<i64: 1, 256, 32>}, {transform_indices = @transform_1, window_bounds = array<i64: 1, 256, 8>}, {pipeline_mode = #tpu.pipeline_mode<synchronous>, transform_indices = @transform_2, window_bounds = array<i64: 32, 128>}, {pipeline_mode = #tpu.pipeline_mode<synchronous>, transform_indices = @transform_3, window_bounds = array<i64: 1, 128>}, {pipeline_mode = #tpu.pipeline_mode<synchronous>, transform_indices = @transform_4, window_bounds = array<i64: 1, 128>}, {pipeline_mode = #tpu.pipeline_mode<synchronous>, transform_indices = @transform_5, window_bounds = array<i64: 1, 128>}, {pipeline_mode = #tpu.pipeline_mode<synchronous>, transform_indices = @transform_6, window_bounds = array<i64: 256, 128>}, {pipeline_mode = #tpu.pipeline_mode<synchronous>, transform_indices = @transform_7, window_bounds = array<i64: 1, 128>}, {pipeline_mode = #tpu.pipeline_mode<synchronous>, transform_indices = @transform_8, window_bounds = array<i64: 1, 128>}, {pipeline_mode = #tpu.pipeline_mode<synchronous>, transform_indices = @transform_9, window_bounds = array<i64: 1, 1>}, {transform_indices = @transform_10, window_bounds = array<i64: 1, 256, 1>}]} {
    %c0 = arith.constant 0 : index
    %c0_0 = arith.constant 0 : index
    %c0_1 = arith.constant 0 : index
    %0 = vector.load %arg1[%c0, %c0_0, %c0_1] : memref<1x256x32xf32, #tpu.memory_space<vmem>>, vector<1x256x32xf32>
    %1 = vector.shape_cast %0 : vector<1x256x32xf32> to vector<256x32xf32>
    %c0_2 = arith.constant 0 : index
    %c0_3 = arith.constant 0 : index
    %2 = vector.load %arg3[%c0_2, %c0_3] : memref<32x128xf32, #tpu.memory_space<vmem>>, vector<32x128xf32>
    %cst = arith.constant dense<0.000000e+00> : vector<256x128xf32>
    %3 = tpu.matmul %1, %2, %cst {dimension_numbers = #tpu.dot_dimension_numbers<[1], [0], [0], [1], [0, 0, 1, 1], [], []>} : vector<256x32xf32>, vector<32x128xf32>, vector<256x128xf32> -> vector<256x128xf32>
    %c0_4 = arith.constant 0 : index
    %c0_5 = arith.constant 0 : index
    %4 = vector.load %arg4[%c0_4, %c0_5] : memref<1x128xf32, #tpu.memory_space<vmem>>, vector<1x128xf32>
    %5 = vector.broadcast %4 : vector<1x128xf32> to vector<256x128xf32>
    %6 = arith.addf %3, %5 : vector<256x128xf32>
    %cst_6 = arith.constant dense<0.000000e+00> : vector<128xf32>
    %7 = vector.multi_reduction <add>, %6, %cst_6 [0] : vector<256x128xf32> to vector<128xf32>
    %8 = vector.shape_cast %7 : vector<128xf32> to vector<1x128xf32>
    %cst_7 = arith.constant 2.560000e+02 : f32
    %9 = vector.broadcast %cst_7 : f32 to vector<1x128xf32>
    %10 = arith.divf %8, %9 : vector<1x128xf32>
    %11 = vector.broadcast %10 : vector<1x128xf32> to vector<256x128xf32>
    %12 = arith.subf %6, %11 : vector<256x128xf32>
    %13 = arith.mulf %12, %12 : vector<256x128xf32>
    %cst_8 = arith.constant dense<0.000000e+00> : vector<128xf32>
    %14 = vector.multi_reduction <add>, %13, %cst_8 [0] : vector<256x128xf32> to vector<128xf32>
    %15 = vector.shape_cast %14 : vector<128xf32> to vector<1x128xf32>
    %cst_9 = arith.constant 2.560000e+02 : f32
    %16 = vector.broadcast %cst_9 : f32 to vector<1x128xf32>
    %17 = arith.divf %15, %16 : vector<1x128xf32>
    %c0_10 = arith.constant 0 : index
    %c0_11 = arith.constant 0 : index
    %18 = vector.load %arg5[%c0_10, %c0_11] : memref<1x128xf32, #tpu.memory_space<vmem>>, vector<1x128xf32>
    %cst_12 = arith.constant 9.99999974E-6 : f32
    %19 = vector.broadcast %cst_12 : f32 to vector<1x128xf32>
    %20 = arith.addf %17, %19 : vector<1x128xf32>
    %21 = math.rsqrt %20 : vector<1x128xf32>
    %22 = arith.mulf %18, %21 : vector<1x128xf32>
    %23 = vector.broadcast %22 : vector<1x128xf32> to vector<256x128xf32>
    %24 = arith.mulf %12, %23 : vector<256x128xf32>
    %c0_13 = arith.constant 0 : index
    %c0_14 = arith.constant 0 : index
    %25 = vector.load %arg6[%c0_13, %c0_14] : memref<1x128xf32, #tpu.memory_space<vmem>>, vector<1x128xf32>
    %26 = vector.broadcast %25 : vector<1x128xf32> to vector<256x128xf32>
    %27 = arith.addf %24, %26 : vector<256x128xf32>
    %cst_15 = arith.constant 0.000000e+00 : f32
    %28 = vector.broadcast %cst_15 : f32 to vector<256x128xf32>
    %29 = arith.maximumf %27, %28 : vector<256x128xf32>
    %30 = arith.truncf %29 : vector<256x128xf32> to vector<256x128xbf16>
    %c0_16 = arith.constant 0 : index
    %c0_17 = arith.constant 0 : index
    %31 = vector.load %arg12[%c0_16, %c0_17] : memref<256x256xbf16, #tpu.memory_space<vmem>>, vector<256x128xbf16>
    tpu.vector_store %arg12[%c0_16, %c0_17], %30 {strides = array<i32>} : memref<256x256xbf16, #tpu.memory_space<vmem>>, vector<256x128xbf16>,
    %cst_18 = arith.constant 0.000000e+00 : bf16
    %32 = vector.broadcast %cst_18 : bf16 to vector<256x128xbf16>
    %c0_19 = arith.constant 0 : index
    %c128 = arith.constant 128 : index
    %33 = vector.load %arg12[%c0_19, %c128] : memref<256x256xbf16, #tpu.memory_space<vmem>>, vector<256x128xbf16>
    tpu.vector_store %arg12[%c0_19, %c128], %32 {strides = array<i32>} : memref<256x256xbf16, #tpu.memory_space<vmem>>, vector<256x128xbf16>,
    %c0_20 = arith.constant 0 : index
    %c0_21 = arith.constant 0 : index
    %c0_22 = arith.constant 0 : index
    %34 = vector.load %arg2[%c0_20, %c0_21, %c0_22] : memref<1x256x8xf32, #tpu.memory_space<vmem>>, vector<1x256x8xf32>
    %35 = vector.shape_cast %34 : vector<1x256x8xf32> to vector<256x8xf32>
    %36 = arith.truncf %35 : vector<256x8xf32> to vector<256x8xbf16>
    %c0_23 = arith.constant 0 : index
    %c128_24 = arith.constant 128 : index
    %37 = vector.load %arg12[%c0_23, %c128_24] : memref<256x256xbf16, #tpu.memory_space<vmem>>, vector<256x8xbf16>
    tpu.vector_store %arg12[%c0_23, %c128_24], %36 {strides = array<i32>} : memref<256x256xbf16, #tpu.memory_space<vmem>>, vector<256x8xbf16>,
    %c0_25 = arith.constant 0 : index
    %c0_26 = arith.constant 0 : index
    %38 = vector.load %arg12[%c0_25, %c0_26] : memref<256x256xbf16, #tpu.memory_space<vmem>>, vector<256x256xbf16>
    %c0_27 = arith.constant 0 : index
    %c0_28 = arith.constant 0 : index
    %39 = vector.load %arg7[%c0_27, %c0_28] : memref<256x128xbf16, #tpu.memory_space<vmem>>, vector<256x128xbf16>
    %cst_29 = arith.constant dense<0.000000e+00> : vector<256x128xf32>
    %40 = tpu.matmul %38, %39, %cst_29 {dimension_numbers = #tpu.dot_dimension_numbers<[1], [0], [0], [1], [0, 0, 1, 1], [], []>} : vector<256x256xbf16>, vector<256x128xbf16>, vector<256x128xf32> -> vector<256x128xf32>
    %c0_30 = arith.constant 0 : index
    %c0_31 = arith.constant 0 : index
    %41 = vector.load %arg8[%c0_30, %c0_31] : memref<1x128xf32, #tpu.memory_space<vmem>>, vector<1x128xf32>
    %42 = vector.broadcast %41 : vector<1x128xf32> to vector<256x128xf32>
    %43 = arith.addf %40, %42 : vector<256x128xf32>
    %cst_32 = arith.constant 0.000000e+00 : f32
    %44 = vector.broadcast %cst_32 : f32 to vector<256x128xf32>
    %45 = arith.maximumf %43, %44 : vector<256x128xf32>
    %c0_33 = arith.constant 0 : index
    %c0_34 = arith.constant 0 : index
    %46 = vector.load %arg9[%c0_33, %c0_34] : memref<1x128xf32, #tpu.memory_space<vmem>>, vector<1x128xf32>
    %47 = vector.broadcast %46 : vector<1x128xf32> to vector<256x128xf32>
    %48 = arith.mulf %45, %47 : vector<256x128xf32>
    %cst_35 = arith.constant dense<0.000000e+00> : vector<256xf32>
    %49 = vector.multi_reduction <add>, %48, %cst_35 [1] : vector<256x128xf32> to vector<256xf32>
    %50 = vector.shape_cast %49 : vector<256xf32> to vector<256x1xf32>
    %c0_36 = arith.constant 0 : index
    %c0_37 = arith.constant 0 : index
    %51 = vector.load %arg10[%c0_36, %c0_37] : memref<1x1xf32, #tpu.memory_space<vmem>>, vector<1x1xf32>
    %52 = vector.broadcast %51 : vector<1x1xf32> to vector<256x1xf32>
    %53 = arith.addf %50, %52 : vector<256x1xf32>
    %c0_38 = arith.constant 0 : index
    %c0_39 = arith.constant 0 : index
    %c0_40 = arith.constant 0 : index
    %54 = vector.load %arg11[%c0_38, %c0_39, %c0_40] : memref<1x256x1xf32, #tpu.memory_space<vmem>>, vector<1x256x1xf32>
    %55 = vector.shape_cast %54 : vector<1x256x1xf32> to vector<256x1xf32>
    %56 = vector.shape_cast %53 : vector<256x1xf32> to vector<1x256x1xf32>
    tpu.vector_store %arg11[%c0_38, %c0_39, %c0_40], %56 {strides = array<i32>} : memref<1x256x1xf32, #tpu.memory_space<vmem>>, vector<1x256x1xf32>,
    return
  }
  func.func @transform_0(%arg0: i32) -> (i32, i32, i32) {
    %c0_i32 = arith.constant 0 : i32
    %c0_i32_0 = arith.constant 0 : i32
    %c0_i32_1 = arith.constant 0 : i32
    return %arg0, %c0_i32, %c0_i32_0 : i32, i32, i32
  }
  func.func @transform_1(%arg0: i32) -> (i32, i32, i32) {
    %c0_i32 = arith.constant 0 : i32
    %c0_i32_0 = arith.constant 0 : i32
    %c0_i32_1 = arith.constant 0 : i32
    return %arg0, %c0_i32, %c0_i32_0 : i32, i32, i32
  }
  func.func @transform_2(%arg0: i32) -> (i32, i32) {
    %c0_i32 = arith.constant 0 : i32
    %c0_i32_0 = arith.constant 0 : i32
    %c0_i32_1 = arith.constant 0 : i32
    return %c0_i32, %c0_i32_0 : i32, i32
  }
  func.func @transform_3(%arg0: i32) -> (i32, i32) {
    %c0_i32 = arith.constant 0 : i32
    %c0_i32_0 = arith.constant 0 : i32
    %c0_i32_1 = arith.constant 0 : i32
    return %c0_i32, %c0_i32_0 : i32, i32
  }
  func.func @transform_4(%arg0: i32) -> (i32, i32) {
    %c0_i32 = arith.constant 0 : i32
    %c0_i32_0 = arith.constant 0 : i32
    %c0_i32_1 = arith.constant 0 : i32
    return %c0_i32, %c0_i32_0 : i32, i32
  }
  func.func @transform_5(%arg0: i32) -> (i32, i32) {
    %c0_i32 = arith.constant 0 : i32
    %c0_i32_0 = arith.constant 0 : i32
    %c0_i32_1 = arith.constant 0 : i32
    return %c0_i32, %c0_i32_0 : i32, i32
  }
  func.func @transform_6(%arg0: i32) -> (i32, i32) {
    %c0_i32 = arith.constant 0 : i32
    %c0_i32_0 = arith.constant 0 : i32
    %c0_i32_1 = arith.constant 0 : i32
    return %c0_i32, %c0_i32_0 : i32, i32
  }
  func.func @transform_7(%arg0: i32) -> (i32, i32) {
    %c0_i32 = arith.constant 0 : i32
    %c0_i32_0 = arith.constant 0 : i32
    %c0_i32_1 = arith.constant 0 : i32
    return %c0_i32, %c0_i32_0 : i32, i32
  }
  func.func @transform_8(%arg0: i32) -> (i32, i32) {
    %c0_i32 = arith.constant 0 : i32
    %c0_i32_0 = arith.constant 0 : i32
    %c0_i32_1 = arith.constant 0 : i32
    return %c0_i32, %c0_i32_0 : i32, i32
  }
  func.func @transform_9(%arg0: i32) -> (i32, i32) {
    %c0_i32 = arith.constant 0 : i32
    %c0_i32_0 = arith.constant 0 : i32
    %c0_i32_1 = arith.constant 0 : i32
    return %c0_i32, %c0_i32_0 : i32, i32
  }
  func.func @transform_10(%arg0: i32) -> (i32, i32, i32) {
    %c0_i32 = arith.constant 0 : i32
    %c0_i32_0 = arith.constant 0 : i32
    %c0_i32_1 = arith.constant 0 : i32
    return %arg0, %c0_i32, %c0_i32_0 : i32, i32, i32
  }
}

</mosaic_0001>

<llo_original>
// kernel: critic_forward.1
$region0: #{critic_forward.1}
  #allocation0 [shape = 'u32[]', space=smem, size = 0x4, offset = 0x4, fixed_abs, tag = 'smem constant byte address 0x4 - core index']
  #allocation1 [shape = 'u32[144,128]{1,0:T(1,128)}', space=vmem, size = 0x12000, scoped, tag = 'internal scratch']
  #allocation2 [shape = 'bf16[256,256]{1,0:T(8,128)(2,1)}', space=vmem, size = 0x20000, scoped, tag = 'scratch operand']
  #allocation3 [shape = 'f32[1,1]{1,0:T(1,128)S(1)}', space=vmem, size = 0x200, scoped, tag = 'scoped memory for critic_forward.1']
  %s0 = inlined_call_operand.vmem [shape: f32[2,256,32], index: 0, kind: input, shape index: {}]
  %s1 = inlined_call_operand.vmem [shape: f32[2,256,8], index: 1, kind: input, shape index: {}]
  %s2 = inlined_call_operand.vmem [shape: f32[32,128], index: 2, kind: input, shape index: {}]
  %s3 = inlined_call_operand.vmem [shape: f32[1,128], index: 3, kind: input, shape index: {}]
  %s4 = inlined_call_operand.vmem [shape: f32[1,128], index: 4, kind: input, shape index: {}]
  %s5 = inlined_call_operand.vmem [shape: f32[1,128], index: 5, kind: input, shape index: {}]
  %s6 = inlined_call_operand.vmem [shape: bf16[256,128], index: 6, kind: input, shape index: {}]
  %s7 = inlined_call_operand.vmem [shape: f32[1,128], index: 7, kind: input, shape index: {}]
  %s8 = inlined_call_operand.vmem [shape: f32[1,128], index: 8, kind: input, shape index: {}]
  %s9 = inlined_call_operand.<no memory space> [shape: f32[1,1], index: 9, kind: input, shape index: {}]
  %s10 = inlined_call_operand.vmem [shape: f32[2,256,1], index: 10, kind: output, shape index: {}]
  %s11 = sld [smem:[#allocation0]]
  $region73: #{critic_forward.1} parent=0
    _
  %s13 = ssub.s32 1, %s11
  %s14 = scalar_select 0, %s13, %s11
  %v15 = vstv %s9
  %16 = vst [vmem:[#allocation3] sm:$0x1] %v15
  loop: start=0, step=1, limit=4
  $region2: #{critic_forward.1} parent=0 // loop_pre_header
    _
  $region3: #{critic_forward.1} parent=0 // loop_header
    %s18 = sphi 0, %s22
    %p19 = scmp.ge.s32.totalorder %s18, 4
    %s28 = sphi 0, %s30
    %s31 = sphi 0, %s28
    %s32 = sphi 0, %s31
    %s48 = sphi 0, %s32
    %s54 = sphi 0, %s56
    %s57 = sphi 0, %s54
    %s58 = sphi 0, %s57
    %s74 = sphi 0, %s58
    %s78 = sphi 0, %s78
    %s80 = sphi 0, %s78
    %s81 = sphi 0, %s80
    %s95 = sphi 0, %s81
    %s99 = sphi 0, %s99
    %s101 = sphi 0, %s99
    %s102 = sphi 0, %s101
    %s116 = sphi 0, %s102
    %s120 = sphi 0, %s120
    %s122 = sphi 0, %s120
    %s123 = sphi 0, %s122
    %s137 = sphi 0, %s123
    %s141 = sphi 0, %s141
    %s143 = sphi 0, %s141
    %s144 = sphi 0, %s143
    %s158 = sphi 0, %s144
    %s162 = sphi 0, %s162
    %s164 = sphi 0, %s162
    %s165 = sphi 0, %s164
    %s179 = sphi 0, %s165
    %s183 = sphi 0, %s183
    %s185 = sphi 0, %s183
    %s186 = sphi 0, %s185
    %s200 = sphi 0, %s186
    %s204 = sphi 0, %s204
    %s206 = sphi 0, %s204
    %s207 = sphi 0, %s206
    %s221 = sphi 0, %s207
    %s225 = sphi 0, %s225
    %s227 = sphi 0, %s225
    %s228 = sphi 0, %s227
    %s242 = sphi 0, %s228
    %s248 = sphi 0, %s250
    %s251 = sphi 0, %s248
    %s252 = sphi 0, %s251
    %s268 = sphi 0, %s252
  $region4: #{critic_forward.1} parent=0 // loop_header_branch
    %21 = sbr.rel (%p19) target = $region8
  $region5: #{critic_forward.1} parent=0 // loop_body
    %s23 = ssub.s32 %s18, 1
    %s24 = ssub.s32 %s18, 2
    %s25 = sadd.s32 %s18, 1
    %s26 = ssub.s32 %s18, %s25
    %p27 = scmp.eq.s32.totalorder %s26, 0
    %s29 = sadd.s32 %s28, 1
    %s30 = scalar_select %p27, %s28, %s29
    %p33 = pneg %p27
    %p34 = scmp.eq.s32.totalorder %s18, 1
    %p35 = por %p33, %p34
    %p36 = scmp.ne.s32.totalorder %s28, %s31
    %p37 = scmp.eq.s32.totalorder %s18, 0
    %p38 = por %p36, %p37
    %p39 = scmp.ne.s32.totalorder %s28, %s31
    %p40 = scmp.eq.s32.totalorder %s23, 1
    %p41 = por %p39, %p40
    %p42 = scmp.ne.s32.totalorder %s31, %s32
    %p43 = scmp.eq.s32.totalorder %s23, 0
    %p44 = por %p42, %p43
    %p45 = scmp.ne.s32.totalorder %s31, %s32
    %p46 = scmp.eq.s32.totalorder %s24, 1
    %p47 = por %p45, %p46
    %p49 = scmp.ne.s32.totalorder %s32, %s48
    %p50 = scmp.eq.s32.totalorder %s24, 0
    %p51 = por %p49, %p50
    %s52 = ssub.s32 %s18, %s25
    %p53 = scmp.eq.s32.totalorder %s52, 0
    %s55 = sadd.s32 %s54, 1
    %s56 = scalar_select %p53, %s54, %s55
    %p59 = pneg %p53
    %p60 = scmp.eq.s32.totalorder %s18, 1
    %p61 = por %p59, %p60
    %p62 = scmp.ne.s32.totalorder %s54, %s57
    %p63 = scmp.eq.s32.totalorder %s18, 0
    %p64 = por %p62, %p63
    %p65 = scmp.ne.s32.totalorder %s54, %s57
    %p66 = scmp.eq.s32.totalorder %s23, 1
    %p67 = por %p65, %p66
    %p68 = scmp.ne.s32.totalorder %s57, %s58
    %p69 = scmp.eq.s32.totalorder %s23, 0
    %p70 = por %p68, %p69
    %p71 = scmp.ne.s32.totalorder %s57, %s58
    %p72 = scmp.eq.s32.totalorder %s24, 1
    %p73 = por %p71, %p72
    %p75 = scmp.ne.s32.totalorder %s58, %s74
    %p76 = scmp.eq.s32.totalorder %s24, 0
    %p77 = por %p75, %p76
    %s79 = sadd.s32 %s78, 1
    %p82 = scmp.eq.s32.totalorder %s18, 1
    %p83 = scmp.ne.s32.totalorder %s78, %s80
    %p84 = scmp.eq.s32.totalorder %s18, 0
    %p85 = por %p83, %p84
    %p86 = scmp.ne.s32.totalorder %s78, %s80
    %p87 = scmp.eq.s32.totalorder %s23, 1
    %p88 = por %p86, %p87
    %p89 = scmp.ne.s32.totalorder %s80, %s81
    %p90 = scmp.eq.s32.totalorder %s23, 0
    %p91 = por %p89, %p90
    %p92 = scmp.ne.s32.totalorder %s80, %s81
    %p93 = scmp.eq.s32.totalorder %s24, 1
    %p94 = por %p92, %p93
    %p96 = scmp.ne.s32.totalorder %s81, %s95
    %p97 = scmp.eq.s32.totalorder %s24, 0
    %p98 = por %p96, %p97
    %s100 = sadd.s32 %s99, 1
    %p103 = scmp.eq.s32.totalorder %s18, 1
    %p104 = scmp.ne.s32.totalorder %s99, %s101
    %p105 = scmp.eq.s32.totalorder %s18, 0
    %p106 = por %p104, %p105
    %p107 = scmp.ne.s32.totalorder %s99, %s101
    %p108 = scmp.eq.s32.totalorder %s23, 1
    %p109 = por %p107, %p108
    %p110 = scmp.ne.s32.totalorder %s101, %s102
    %p111 = scmp.eq.s32.totalorder %s23, 0
    %p112 = por %p110, %p111
    %p113 = scmp.ne.s32.totalorder %s101, %s102
    %p114 = scmp.eq.s32.totalorder %s24, 1
    %p115 = por %p113, %p114
    %p117 = scmp.ne.s32.totalorder %s102, %s116
    %p118 = scmp.eq.s32.totalorder %s24, 0
    %p119 = por %p117, %p118
    %s121 = sadd.s32 %s120, 1
    %p124 = scmp.eq.s32.totalorder %s18, 1
    %p125 = scmp.ne.s32.totalorder %s120, %s122
    %p126 = scmp.eq.s32.totalorder %s18, 0
    %p127 = por %p125, %p126
    %p128 = scmp.ne.s32.totalorder %s120, %s122
    %p129 = scmp.eq.s32.totalorder %s23, 1
    %p130 = por %p128, %p129
    %p131 = scmp.ne.s32.totalorder %s122, %s123
    %p132 = scmp.eq.s32.totalorder %s23, 0
    %p133 = por %p131, %p132
    %p134 = scmp.ne.s32.totalorder %s122, %s123
    %p135 = scmp.eq.s32.totalorder %s24, 1
    %p136 = por %p134, %p135
    %p138 = scmp.ne.s32.totalorder %s123, %s137
    %p139 = scmp.eq.s32.totalorder %s24, 0
    %p140 = por %p138, %p139
    %s142 = sadd.s32 %s141, 1
    %p145 = scmp.eq.s32.totalorder %s18, 1
    %p146 = scmp.ne.s32.totalorder %s141, %s143
    %p147 = scmp.eq.s32.totalorder %s18, 0
    %p148 = por %p146, %p147
    %p149 = scmp.ne.s32.totalorder %s141, %s143
    %p150 = scmp.eq.s32.totalorder %s23, 1
    %p151 = por %p149, %p150
    %p152 = scmp.ne.s32.totalorder %s143, %s144
    %p153 = scmp.eq.s32.totalorder %s23, 0
    %p154 = por %p152, %p153
    %p155 = scmp.ne.s32.totalorder %s143, %s144
    %p156 = scmp.eq.s32.totalorder %s24, 1
    %p157 = por %p155, %p156
    %p159 = scmp.ne.s32.totalorder %s144, %s158
    %p160 = scmp.eq.s32.totalorder %s24, 0
    %p161 = por %p159, %p160
    %s163 = sadd.s32 %s162, 1
    %p166 = scmp.eq.s32.totalorder %s18, 1
    %p167 = scmp.ne.s32.totalorder %s162, %s164
    %p168 = scmp.eq.s32.totalorder %s18, 0
    %p169 = por %p167, %p168
    %p170 = scmp.ne.s32.totalorder %s162, %s164
    %p171 = scmp.eq.s32.totalorder %s23, 1
    %p172 = por %p170, %p171
    %p173 = scmp.ne.s32.totalorder %s164, %s165
    %p174 = scmp.eq.s32.totalorder %s23, 0
    %p175 = por %p173, %p174
    %p176 = scmp.ne.s32.totalorder %s164, %s165
    %p177 = scmp.eq.s32.totalorder %s24, 1
    %p178 = por %p176, %p177
    %p180 = scmp.ne.s32.totalorder %s165, %s179
    %p181 = scmp.eq.s32.totalorder %s24, 0
    %p182 = por %p180, %p181
    %s184 = sadd.s32 %s183, 1
    %p187 = scmp.eq.s32.totalorder %s18, 1
    %p188 = scmp.ne.s32.totalorder %s183, %s185
    %p189 = scmp.eq.s32.totalorder %s18, 0
    %p190 = por %p188, %p189
    %p191 = scmp.ne.s32.totalorder %s183, %s185
    %p192 = scmp.eq.s32.totalorder %s23, 1
    %p193 = por %p191, %p192
    %p194 = scmp.ne.s32.totalorder %s185, %s186
    %p195 = scmp.eq.s32.totalorder %s23, 0
    %p196 = por %p194, %p195
    %p197 = scmp.ne.s32.totalorder %s185, %s186
    %p198 = scmp.eq.s32.totalorder %s24, 1
    %p199 = por %p197, %p198
    %p201 = scmp.ne.s32.totalorder %s186, %s200
    %p202 = scmp.eq.s32.totalorder %s24, 0
    %p203 = por %p201, %p202
    %s205 = sadd.s32 %s204, 1
    %p208 = scmp.eq.s32.totalorder %s18, 1
    %p209 = scmp.ne.s32.totalorder %s204, %s206
    %p210 = scmp.eq.s32.totalorder %s18, 0
    %p211 = por %p209, %p210
    %p212 = scmp.ne.s32.totalorder %s204, %s206
    %p213 = scmp.eq.s32.totalorder %s23, 1
    %p214 = por %p212, %p213
    %p215 = scmp.ne.s32.totalorder %s206, %s207
    %p216 = scmp.eq.s32.totalorder %s23, 0
    %p217 = por %p215, %p216
    %p218 = scmp.ne.s32.totalorder %s206, %s207
    %p219 = scmp.eq.s32.totalorder %s24, 1
    %p220 = por %p218, %p219
    %p222 = scmp.ne.s32.totalorder %s207, %s221
    %p223 = scmp.eq.s32.totalorder %s24, 0
    %p224 = por %p222, %p223
    %s226 = sadd.s32 %s225, 1
    %p229 = scmp.eq.s32.totalorder %s18, 1
    %p230 = scmp.ne.s32.totalorder %s225, %s227
    %p231 = scmp.eq.s32.totalorder %s18, 0
    %p232 = por %p230, %p231
    %p233 = scmp.ne.s32.totalorder %s225, %s227
    %p234 = scmp.eq.s32.totalorder %s23, 1
    %p235 = por %p233, %p234
    %p236 = scmp.ne.s32.totalorder %s227, %s228
    %p237 = scmp.eq.s32.totalorder %s23, 0
    %p238 = por %p236, %p237
    %p239 = scmp.ne.s32.totalorder %s227, %s228
    %p240 = scmp.eq.s32.totalorder %s24, 1
    %p241 = por %p239, %p240
    %p243 = scmp.ne.s32.totalorder %s228, %s242
    %p244 = scmp.eq.s32.totalorder %s24, 0
    %p245 = por %p243, %p244
    %s246 = ssub.s32 %s18, %s25
    %p247 = scmp.eq.s32.totalorder %s246, 0
    %s249 = sadd.s32 %s248, 1
    %s250 = scalar_select %p247, %s248, %s249
    %p253 = pneg %p247
    %p254 = scmp.eq.s32.totalorder %s18, 1
    %p255 = por %p253, %p254
    %p256 = scmp.ne.s32.totalorder %s248, %s251
    %p257 = scmp.eq.s32.totalorder %s18, 0
    %p258 = por %p256, %p257
    %p259 = scmp.ne.s32.totalorder %s248, %s251
    %p260 = scmp.eq.s32.totalorder %s23, 1
    %p261 = por %p259, %p260
    %p262 = scmp.ne.s32.totalorder %s251, %s252
    %p263 = scmp.eq.s32.totalorder %s23, 0
    %p264 = por %p262, %p263
    %p265 = scmp.ne.s32.totalorder %s251, %s252
    %p266 = scmp.eq.s32.totalorder %s24, 1
    %p267 = por %p265, %p266
    %p269 = scmp.ne.s32.totalorder %s252, %s268
    %p270 = scmp.eq.s32.totalorder %s24, 0
    %p271 = por %p269, %p270
    %p272 = scmp.le.s32.totalorder 1, %s18
    %p273 = scmp.lt.s32.totalorder %s18, 3
    %p274 = pnand %p272, %p273
    %p275 = pneg %p274
    // Predicated region
    $region9: #{critic_forward.1} parent=5 // pred_check
      _
    $region10: #{critic_forward.1} parent=5 // pred_check_branch
      %277 = sbr.rel (%p274) target = $region12
    $region11: #{critic_forward.1} parent=5 // pred_region
      %s278 = ssub.s32 %s18, 1
      // Predicated region
      $region13: #{critic_forward.1} parent=11 // pred_check
        %p279 = pneg %p91
      $region14: #{critic_forward.1} parent=11 // pred_check_branch
        %281 = sbr.rel (%p279) target = $region16
      $region15: #{critic_forward.1} parent=11 // pred_region
        _
      $region16: #{critic_forward.1} parent=11 // pred_fallthru
        _
      // Predicated region
      $region17: #{critic_forward.1} parent=11 // pred_check
        %p282 = pneg %p112
      $region18: #{critic_forward.1} parent=11 // pred_check_branch
        %284 = sbr.rel (%p282) target = $region20
      $region19: #{critic_forward.1} parent=11 // pred_region
        _
      $region20: #{critic_forward.1} parent=11 // pred_fallthru
        _
      // Predicated region
      $region21: #{critic_forward.1} parent=11 // pred_check
        %p285 = pneg %p133
      $region22: #{critic_forward.1} parent=11 // pred_check_branch
        %287 = sbr.rel (%p285) target = $region24
      $region23: #{critic_forward.1} parent=11 // pred_region
        _
      $region24: #{critic_forward.1} parent=11 // pred_fallthru
        _
      // Predicated region
      $region25: #{critic_forward.1} parent=11 // pred_check
        %p288 = pneg %p154
      $region26: #{critic_forward.1} parent=11 // pred_check_branch
        %290 = sbr.rel (%p288) target = $region28
      $region27: #{critic_forward.1} parent=11 // pred_region
        _
      $region28: #{critic_forward.1} parent=11 // pred_fallthru
        _
      // Predicated region
      $region29: #{critic_forward.1} parent=11 // pred_check
        %p291 = pneg %p175
      $region30: #{critic_forward.1} parent=11 // pred_check_branch
        %293 = sbr.rel (%p291) target = $region32
      $region31: #{critic_forward.1} parent=11 // pred_region
        _
      $region32: #{critic_forward.1} parent=11 // pred_fallthru
        _
      // Predicated region
      $region33: #{critic_forward.1} parent=11 // pred_check
        %p294 = pneg %p196
      $region34: #{critic_forward.1} parent=11 // pred_check_branch
        %296 = sbr.rel (%p294) target = $region36
      $region35: #{critic_forward.1} parent=11 // pred_region
        _
      $region36: #{critic_forward.1} parent=11 // pred_fallthru
        _
      // Predicated region
      $region37: #{critic_forward.1} parent=11 // pred_check
        %p297 = pneg %p217
      $region38: #{critic_forward.1} parent=11 // pred_check_branch
        %299 = sbr.rel (%p297) target = $region40
      $region39: #{critic_forward.1} parent=11 // pred_region
        _
      $region40: #{critic_forward.1} parent=11 // pred_fallthru
        _
      // Predicated region
      $region41: #{critic_forward.1} parent=11 // pred_check
        %p300 = pneg %p238
      $region42: #{critic_forward.1} parent=11 // pred_check_branch
        %302 = sbr.rel (%p300) target = $region44
      $region43: #{critic_forward.1} parent=11 // pred_region
        _
      $region44: #{critic_forward.1} parent=11 // pred_fallthru
        _
    $region12: #{critic_forward.1} parent=5 // pred_fallthru
      _
    %p303 = scmp.lt.s32.totalorder %s18, 2
    // Predicated region
    $region45: #{critic_forward.1} parent=5 // pred_check
      %p304 = pneg %p303
    $region46: #{critic_forward.1} parent=5 // pred_check_branch
      %306 = sbr.rel (%p304) target = $region48
    $region47: #{critic_forward.1} parent=5 // pred_region
      // Predicated region
      $region49: #{critic_forward.1} parent=47 // pred_check
        %p307 = pneg %p38
      $region50: #{critic_forward.1} parent=47 // pred_check_branch
        %309 = sbr.rel (%p307) target = $region52
      $region51: #{critic_forward.1} parent=47 // pred_region
        %p310 = scmp.lt.s32.totalorder %s18, 1
        %s311 = scalar_select %p310, %s18, 1
        %s312 = smul.addr %s311, 32
        %s313 = smul.addr %s312, 8
        %s314 = scalar_lea.vmem %s0, %s313
      $region52: #{critic_forward.1} parent=47 // pred_fallthru
        _
      // Predicated region
      $region53: #{critic_forward.1} parent=47 // pred_check
        %p315 = pneg %p64
      $region54: #{critic_forward.1} parent=47 // pred_check_branch
        %317 = sbr.rel (%p315) target = $region56
      $region55: #{critic_forward.1} parent=47 // pred_region
        %p318 = scmp.lt.s32.totalorder %s18, 1
        %s319 = scalar_select %p318, %s18, 1
        %s320 = smul.addr %s319, 32
        %s321 = smul.addr %s320, 8
        %s322 = scalar_lea.vmem %s1, %s321
      $region56: #{critic_forward.1} parent=47 // pred_fallthru
        _
    $region48: #{critic_forward.1} parent=5 // pred_fallthru
      _
    %p323 = scmp.le.s32.totalorder 1, %s18
    %p324 = scmp.lt.s32.totalorder %s18, 3
    %p325 = pnand %p323, %p324
    %p326 = pneg %p325
    // Predicated region
    $region57: #{critic_forward.1} parent=5 // pred_check
      _
    $region58: #{critic_forward.1} parent=5 // pred_check_branch
      %328 = sbr.rel (%p325) target = $region60
    $region59: #{critic_forward.1} parent=5 // pred_region
      %s329 = ssub.s32 %s18, 1
      %p330 = scmp.lt.s32.totalorder %s23, 1
      %s331 = scalar_select %p330, %s23, 1
      %s332 = smul.addr %s331, 32
      %s333 = smul.addr %s332, 8
      %s334 = scalar_lea.vmem %s0, %s333
      %p335 = pneg %p44
      %p336 = pneg %p41
      %p337 = scmp.lt.s32.totalorder %s23, 1
      %s338 = scalar_select %p337, %s23, 1
      %s339 = smul.addr %s338, 32
      %s340 = smul.addr %s339, 8
      %s341 = scalar_lea.vmem %s1, %s340
      %p342 = pneg %p70
      %p343 = pneg %p67
      %p344 = pneg %p91
      %p345 = pneg %p88
      %p346 = pneg %p112
      %p347 = pneg %p109
      %p348 = pneg %p133
      %p349 = pneg %p130
      %p350 = pneg %p154
      %p351 = pneg %p151
      %p352 = pneg %p175
      %p353 = pneg %p172
      %p354 = pneg %p196
      %p355 = pneg %p193
      %p356 = pneg %p217
      %p357 = pneg %p214
      %p358 = pneg %p238
      %p359 = pneg %p235
      %p360 = pneg %p264
      %p361 = pneg %p261
      %p362 = scmp.lt.s32.totalorder %s23, 1
      %s363 = scalar_select %p362, %s23, 1
      %s364 = smul.addr %s363, 32
      %s365 = smul.addr %s364, 8
      %s366 = scalar_lea.vmem %s10, %s365
      %p367 = scmp.lt.s32.totalorder %s23, 1
      %s368 = scalar_select %p367, %s23, 1
      %s369 = smul.addr %s368, 32
      %s370 = smul.addr %s369, 8
      %s371 = scalar_lea.vmem %s0, %s370
      %p372 = scmp.lt.s32.totalorder %s23, 1
      %s373 = scalar_select %p372, %s23, 1
      %s374 = smul.addr %s373, 32
      %s375 = smul.addr %s374, 8
      %s376 = scalar_lea.vmem %s1, %s375
      %p377 = scmp.lt.s32.totalorder %s23, 1
      %s378 = scalar_select %p377, %s23, 1
      %s379 = smul.addr %s378, 32
      %s380 = smul.addr %s379, 8
      %s381 = scalar_lea.vmem %s10, %s380
      %v383 = vld [vmem:[%s371] sm:$0xff]
      %v384 = vld [vmem:[%s371 + $0x8] sm:$0xff]
      %v385 = vld [vmem:[%s371 + $0x10] sm:$0xff]
      %v386 = vld [vmem:[%s371 + $0x18] sm:$0xff]
      %v387 = vld [vmem:[%s371 + $0x20] sm:$0xff]
      %v388 = vld [vmem:[%s371 + $0x28] sm:$0xff]
      %v389 = vld [vmem:[%s371 + $0x30] sm:$0xff]
      %v390 = vld [vmem:[%s371 + $0x38] sm:$0xff]
      %v391 = vld [vmem:[%s371 + $0x40] sm:$0xff]
      %v392 = vld [vmem:[%s371 + $0x48] sm:$0xff]
      %v393 = vld [vmem:[%s371 + $0x50] sm:$0xff]
      %v394 = vld [vmem:[%s371 + $0x58] sm:$0xff]
      %v395 = vld [vmem:[%s371 + $0x60] sm:$0xff]
      %v396 = vld [vmem:[%s371 + $0x68] sm:$0xff]
      %v397 = vld [vmem:[%s371 + $0x70] sm:$0xff]
      %v398 = vld [vmem:[%s371 + $0x78] sm:$0xff]
      %v399 = vld [vmem:[%s371 + $0x80] sm:$0xff]
      %v400 = vld [vmem:[%s371 + $0x88] sm:$0xff]
      %v401 = vld [vmem:[%s371 + $0x90] sm:$0xff]
      %v402 = vld [vmem:[%s371 + $0x98] sm:$0xff]
      %v403 = vld [vmem:[%s371 + $0xa0] sm:$0xff]
      %v404 = vld [vmem:[%s371 + $0xa8] sm:$0xff]
      %v405 = vld [vmem:[%s371 + $0xb0] sm:$0xff]
      %v406 = vld [vmem:[%s371 + $0xb8] sm:$0xff]
      %v407 = vld [vmem:[%s371 + $0xc0] sm:$0xff]
      %v408 = vld [vmem:[%s371 + $0xc8] sm:$0xff]
      %v409 = vld [vmem:[%s371 + $0xd0] sm:$0xff]
      %v410 = vld [vmem:[%s371 + $0xd8] sm:$0xff]
      %v411 = vld [vmem:[%s371 + $0xe0] sm:$0xff]
      %v412 = vld [vmem:[%s371 + $0xe8] sm:$0xff]
      %v413 = vld [vmem:[%s371 + $0xf0] sm:$0xff]
      %v414 = vld [vmem:[%s371 + $0xf8] sm:$0xff]
      %v415 = vld [vmem:[%s2] sm:$0xff]
      %v416 = vld [vmem:[%s2 + $0x8] sm:$0xff]
      %v417 = vld [vmem:[%s2 + $0x10] sm:$0xff]
      %v418 = vld [vmem:[%s2 + $0x18] sm:$0xff]
      %v419 = vld [vmem:[%s3] sm:$0x1]
      %v421 = vlaneseq
      %v422 = vshrl.u32 %v421, 7
      %v423 = vsub.s32 0, %v422
      %v424 = vrot.slane %v419, %v423
      %vm426 = vcmask 261120
      %v428 = vsel %vm426, %v383, 0
      %v431 = vsel %vm426, %v384, 0
      %v434 = vsel %vm426, %v385, 0
      %v437 = vsel %vm426, %v386, 0
      %v440 = vsel %vm426, %v387, 0
      %v443 = vsel %vm426, %v388, 0
      %v446 = vsel %vm426, %v389, 0
      %v449 = vsel %vm426, %v390, 0
      %v452 = vsel %vm426, %v391, 0
      %v455 = vsel %vm426, %v392, 0
      %v458 = vsel %vm426, %v393, 0
      %v461 = vsel %vm426, %v394, 0
      %v464 = vsel %vm426, %v395, 0
      %v467 = vsel %vm426, %v396, 0
      %v470 = vsel %vm426, %v397, 0
      %v473 = vsel %vm426, %v398, 0
      %v476 = vsel %vm426, %v399, 0
      %v479 = vsel %vm426, %v400, 0
      %v482 = vsel %vm426, %v401, 0
      %v485 = vsel %vm426, %v402, 0
      %v488 = vsel %vm426, %v403, 0
      %v491 = vsel %vm426, %v404, 0
      %v494 = vsel %vm426, %v405, 0
      %v497 = vsel %vm426, %v406, 0
      %v500 = vsel %vm426, %v407, 0
      %v503 = vsel %vm426, %v408, 0
      %v506 = vsel %vm426, %v409, 0
      %v509 = vsel %vm426, %v410, 0
      %v512 = vsel %vm426, %v411, 0
      %v515 = vsel %vm426, %v412, 0
      %v518 = vsel %vm426, %v413, 0
      %v521 = vsel %vm426, %v414, 0
      %523 = vmatprep.subr.mxu0 0.0
      %524 = vmatpush1.msra.mxu0 0.0
      %525 = vmatprep.subr.mxu0 0.0
      %526 = vmatpush1.msra.mxu0 0.0
      %527 = vmatprep.subr.mxu0 0.0
      %528 = vmatpush1.msra.mxu0 0.0
      %529 = vmatprep.subr.mxu0 0.0
      %530 = vmatpush1.msra.mxu0 0.0
      %531 = vmatprep.subr.mxu0 0.0
      %532 = vmatpush1.msra.mxu0 0.0
      %533 = vmatprep.subr.mxu0 0.0
      %534 = vmatpush1.msra.mxu0 0.0
      %535 = vmatprep.subr.mxu0 0.0
      %536 = vmatpush1.msra.mxu0 0.0
      %537 = vmatprep.subr.mxu0 0.0
      %538 = vmatpush1.msra.mxu0 0.0
      %539 = vmatprep.subr.mxu0 0.0
      %540 = vmatpush1.msra.mxu0 0.0
      %541 = vmatprep.subr.mxu0 0.0
      %542 = vmatpush1.msra.mxu0 0.0
      %543 = vmatprep.subr.mxu0 0.0
      %544 = vmatpush1.msra.mxu0 0.0
      %545 = vmatprep.subr.mxu0 0.0
      %546 = vmatpush1.msra.mxu0 0.0
      %547 = vmatprep.subr.mxu0 0.0
      %548 = vmatpush1.msra.mxu0 %v418
      %549 = vmatprep.subr.mxu0 0.0
      %550 = vmatpush1.msra.mxu0 %v417
      %551 = vmatprep.subr.mxu0 0.0
      %552 = vmatpush1.msra.mxu0 %v416
      %553 = vmatprep.subr.mxu0 0.0
      %554 = vmatpush1.msra.mxu0 %v415
      %555 = vmatprep.subr.mxu0 0.0
      %556 = vmatpush2.msra.mxu0 0.0
      %557 = vmatprep.subr.mxu0 0.0
      %558 = vmatpush2.msra.mxu0 0.0
      %559 = vmatprep.subr.mxu0 0.0
      %560 = vmatpush2.msra.mxu0 0.0
      %561 = vmatprep.subr.mxu0 0.0
      %562 = vmatpush2.msra.mxu0 0.0
      %563 = vmatprep.subr.mxu0 0.0
      %564 = vmatpush2.msra.mxu0 0.0
      %565 = vmatprep.subr.mxu0 0.0
      %566 = vmatpush2.msra.mxu0 0.0
      %567 = vmatprep.subr.mxu0 0.0
      %568 = vmatpush2.msra.mxu0 0.0
      %569 = vmatprep.subr.mxu0 0.0
      %570 = vmatpush2.msra.mxu0 0.0
      %571 = vmatprep.subr.mxu0 0.0
      %572 = vmatpush2.msra.mxu0 0.0
      %573 = vmatprep.subr.mxu0 0.0
      %574 = vmatpush2.msra.mxu0 0.0
      %575 = vmatprep.subr.mxu0 0.0
      %576 = vmatpush2.msra.mxu0 0.0
      %577 = vmatprep.subr.mxu0 0.0
      %578 = vmatpush2.msra.mxu0 0.0
      %579 = vmatprep.subr.mxu0 0.0
      %580 = vmatpush2.msra.mxu0 0.0
      %581 = vmatprep.subr.mxu0 0.0
      %582 = vmatpush2.msra.mxu0 0.0
      %583 = vmatprep.subr.mxu0 0.0
      %584 = vmatpush2.msra.mxu0 0.0
      %585 = vmatprep.subr.mxu0 0.0
      %586 = vmatpush2.msra.mxu0 0.0
      %587 = vmatprep.mubr.f32.mxu0 0.0
      %588 = vmatmul.mubr.f32.gmra.mxu0 %v428
      %v589 = vpop.f32.mrf.mxu0
      %v590 = vadd.f32 %v424, %v589
      %v591 = vpop.f32.mrf.mxu0
      %592 = vmatprep.mubr.f32.mxu0 0.0
      %593 = vmatmul.mubr.f32.gmra.mxu0 %v431
      %v594 = vpop.f32.mrf.mxu0
      %v595 = vadd.f32 %v424, %v594
      %v596 = vpop.f32.mrf.mxu0
      %597 = vmatprep.mubr.f32.mxu0 0.0
      %598 = vmatmul.mubr.f32.gmra.mxu0 %v434
      %v599 = vpop.f32.mrf.mxu0
      %v600 = vadd.f32 %v424, %v599
      %v601 = vpop.f32.mrf.mxu0
      %602 = vmatprep.mubr.f32.mxu0 0.0
      %603 = vmatmul.mubr.f32.gmra.mxu0 %v437
      %v604 = vpop.f32.mrf.mxu0
      %v605 = vadd.f32 %v424, %v604
      %v606 = vpop.f32.mrf.mxu0
      %607 = vmatprep.mubr.f32.mxu0 0.0
      %608 = vmatmul.mubr.f32.gmra.mxu0 %v440
      %v609 = vpop.f32.mrf.mxu0
      %v610 = vadd.f32 %v424, %v609
      %v611 = vpop.f32.mrf.mxu0
      %612 = vmatprep.mubr.f32.mxu0 0.0
      %613 = vmatmul.mubr.f32.gmra.mxu0 %v443
      %v614 = vpop.f32.mrf.mxu0
      %v615 = vadd.f32 %v424, %v614
      %v616 = vpop.f32.mrf.mxu0
      %617 = vmatprep.mubr.f32.mxu0 0.0
      %618 = vmatmul.mubr.f32.gmra.mxu0 %v446
      %v619 = vpop.f32.mrf.mxu0
      %v620 = vadd.f32 %v424, %v619
      %v621 = vpop.f32.mrf.mxu0
      %622 = vmatprep.mubr.f32.mxu0 0.0
      %623 = vmatmul.mubr.f32.gmra.mxu0 %v449
      %v624 = vpop.f32.mrf.mxu0
      %v625 = vadd.f32 %v424, %v624
      %v626 = vpop.f32.mrf.mxu0
      %627 = vmatprep.mubr.f32.mxu0 0.0
      %628 = vmatmul.mubr.f32.gmra.mxu0 %v452
      %v629 = vpop.f32.mrf.mxu0
      %v630 = vadd.f32 %v424, %v629
      %v631 = vpop.f32.mrf.mxu0
      %632 = vmatprep.mubr.f32.mxu0 0.0
      %633 = vmatmul.mubr.f32.gmra.mxu0 %v455
      %v634 = vpop.f32.mrf.mxu0
      %v635 = vadd.f32 %v424, %v634
      %v636 = vpop.f32.mrf.mxu0
      %637 = vmatprep.mubr.f32.mxu0 0.0
      %638 = vmatmul.mubr.f32.gmra.mxu0 %v458
      %v639 = vpop.f32.mrf.mxu0
      %v640 = vadd.f32 %v424, %v639
      %v641 = vpop.f32.mrf.mxu0
      %642 = vmatprep.mubr.f32.mxu0 0.0
      %643 = vmatmul.mubr.f32.gmra.mxu0 %v461
      %v644 = vpop.f32.mrf.mxu0
      %v645 = vadd.f32 %v424, %v644
      %v646 = vpop.f32.mrf.mxu0
      %647 = vmatprep.mubr.f32.mxu0 0.0
      %648 = vmatmul.mubr.f32.gmra.mxu0 %v464
      %v649 = vpop.f32.mrf.mxu0
      %v650 = vadd.f32 %v424, %v649
      %v651 = vpop.f32.mrf.mxu0
      %652 = vmatprep.mubr.f32.mxu0 0.0
      %653 = vmatmul.mubr.f32.gmra.mxu0 %v467
      %v654 = vpop.f32.mrf.mxu0
      %v655 = vadd.f32 %v424, %v654
      %v656 = vpop.f32.mrf.mxu0
      %657 = vmatprep.mubr.f32.mxu0 0.0
      %658 = vmatmul.mubr.f32.gmra.mxu0 %v470
      %v659 = vpop.f32.mrf.mxu0
      %v660 = vadd.f32 %v424, %v659
      %v661 = vpop.f32.mrf.mxu0
      %662 = vmatprep.mubr.f32.mxu0 0.0
      %663 = vmatmul.mubr.f32.gmra.mxu0 %v473
      %v664 = vpop.f32.mrf.mxu0
      %v665 = vadd.f32 %v424, %v664
      %v666 = vpop.f32.mrf.mxu0
      %667 = vmatprep.mubr.f32.mxu0 0.0
      %668 = vmatmul.mubr.f32.gmra.mxu0 %v476
      %v669 = vpop.f32.mrf.mxu0
      %v670 = vadd.f32 %v424, %v669
      %v671 = vpop.f32.mrf.mxu0
      %672 = vmatprep.mubr.f32.mxu0 0.0
      %673 = vmatmul.mubr.f32.gmra.mxu0 %v479
      %v674 = vpop.f32.mrf.mxu0
      %v675 = vadd.f32 %v424, %v674
      %v676 = vpop.f32.mrf.mxu0
      %677 = vmatprep.mubr.f32.mxu0 0.0
      %678 = vmatmul.mubr.f32.gmra.mxu0 %v482
      %v679 = vpop.f32.mrf.mxu0
      %v680 = vadd.f32 %v424, %v679
      %v681 = vpop.f32.mrf.mxu0
      %682 = vmatprep.mubr.f32.mxu0 0.0
      %683 = vmatmul.mubr.f32.gmra.mxu0 %v485
      %v684 = vpop.f32.mrf.mxu0
      %v685 = vadd.f32 %v424, %v684
      %v686 = vpop.f32.mrf.mxu0
      %687 = vmatprep.mubr.f32.mxu0 0.0
      %688 = vmatmul.mubr.f32.gmra.mxu0 %v488
      %v689 = vpop.f32.mrf.mxu0
      %v690 = vadd.f32 %v424, %v689
      %v691 = vpop.f32.mrf.mxu0
      %692 = vmatprep.mubr.f32.mxu0 0.0
      %693 = vmatmul.mubr.f32.gmra.mxu0 %v491
      %v694 = vpop.f32.mrf.mxu0
      %v695 = vadd.f32 %v424, %v694
      %v696 = vpop.f32.mrf.mxu0
      %697 = vmatprep.mubr.f32.mxu0 0.0
      %698 = vmatmul.mubr.f32.gmra.mxu0 %v494
      %v699 = vpop.f32.mrf.mxu0
      %v700 = vadd.f32 %v424, %v699
      %v701 = vpop.f32.mrf.mxu0
      %702 = vmatprep.mubr.f32.mxu0 0.0
      %703 = vmatmul.mubr.f32.gmra.mxu0 %v497
      %v704 = vpop.f32.mrf.mxu0
      %v705 = vadd.f32 %v424, %v704
      %v706 = vpop.f32.mrf.mxu0
      %707 = vmatprep.mubr.f32.mxu0 0.0
      %708 = vmatmul.mubr.f32.gmra.mxu0 %v500
      %v709 = vpop.f32.mrf.mxu0
      %v710 = vadd.f32 %v424, %v709
      %v711 = vpop.f32.mrf.mxu0
      %712 = vmatprep.mubr.f32.mxu0 0.0
      %713 = vmatmul.mubr.f32.gmra.mxu0 %v503
      %v714 = vpop.f32.mrf.mxu0
      %v715 = vadd.f32 %v424, %v714
      %v716 = vpop.f32.mrf.mxu0
      %717 = vmatprep.mubr.f32.mxu0 0.0
      %718 = vmatmul.mubr.f32.gmra.mxu0 %v506
      %v719 = vpop.f32.mrf.mxu0
      %v720 = vadd.f32 %v424, %v719
      %v721 = vpop.f32.mrf.mxu0
      %722 = vmatprep.mubr.f32.mxu0 0.0
      %723 = vmatmul.mubr.f32.gmra.mxu0 %v509
      %v724 = vpop.f32.mrf.mxu0
      %v725 = vadd.f32 %v424, %v724
      %v726 = vpop.f32.mrf.mxu0
      %727 = vmatprep.mubr.f32.mxu0 0.0
      %728 = vmatmul.mubr.f32.gmra.mxu0 %v512
      %v729 = vpop.f32.mrf.mxu0
      %v730 = vadd.f32 %v424, %v729
      %v731 = vpop.f32.mrf.mxu0
      %732 = vmatprep.mubr.f32.mxu0 0.0
      %733 = vmatmul.mubr.f32.gmra.mxu0 %v515
      %v734 = vpop.f32.mrf.mxu0
      %v735 = vadd.f32 %v424, %v734
      %v736 = vpop.f32.mrf.mxu0
      %737 = vmatprep.mubr.f32.mxu0 0.0
      %738 = vmatmul.mubr.f32.gmra.mxu0 %v518
      %v739 = vpop.f32.mrf.mxu0
      %v740 = vadd.f32 %v424, %v739
      %v741 = vpop.f32.mrf.mxu0
      %742 = vmatprep.mubr.f32.mxu0 0.0
      %743 = vmatmul.mubr.f32.gmra.mxu0 %v521
      %v744 = vpop.f32.mrf.mxu0
      %v745 = vadd.f32 %v424, %v744
      %v746 = vpop.f32.mrf.mxu0
      %747 = vdwg.mxu0
      %v748 = vadd.f32 %v590, %v595
      %v749 = vadd.f32 %v748, %v600
      %v750 = vadd.f32 %v749, %v605
      %v751 = vadd.f32 %v750, %v610
      %v752 = vadd.f32 %v751, %v615
      %v753 = vadd.f32 %v752, %v620
      %v754 = vadd.f32 %v753, %v625
      %v755 = vadd.f32 %v754, %v630
      %v756 = vadd.f32 %v755, %v635
      %v757 = vadd.f32 %v756, %v640
      %v758 = vadd.f32 %v757, %v645
      %v759 = vadd.f32 %v758, %v650
      %v760 = vadd.f32 %v759, %v655
      %v761 = vadd.f32 %v760, %v660
      %v762 = vadd.f32 %v761, %v665
      %v763 = vadd.f32 %v762, %v670
      %v764 = vadd.f32 %v763, %v675
      %v765 = vadd.f32 %v764, %v680
      %v766 = vadd.f32 %v765, %v685
      %v767 = vadd.f32 %v766, %v690
      %v768 = vadd.f32 %v767, %v695
      %v769 = vadd.f32 %v768, %v700
      %v770 = vadd.f32 %v769, %v705
      %v771 = vadd.f32 %v770, %v710
      %v772 = vadd.f32 %v771, %v715
      %v773 = vadd.f32 %v772, %v720
      %v774 = vadd.f32 %v773, %v725
      %v775 = vadd.f32 %v774, %v730
      %v776 = vadd.f32 %v775, %v735
      %v777 = vadd.f32 %v776, %v740
      %v778 = vadd.f32 %v777, %v745
      %v779 = vrot.slane %v778, 4
      %v780 = vadd.f32 %v778, %v779
      %v781 = vrot.slane %v780, 2
      %v782 = vadd.f32 %v780, %v781
      %v783 = vrot.slane %v782, 1
      %v784 = vadd.f32 %v782, %v783
      %v785 = vrcp.pop 256.0
      %v786 = vmul.f32 %v784, %v785
      %v787 = vsub.f32 %v590, %v786
      %v788 = vsub.f32 %v595, %v786
      %v789 = vsub.f32 %v600, %v786
      %v790 = vsub.f32 %v605, %v786
      %v791 = vsub.f32 %v610, %v786
      %v792 = vsub.f32 %v615, %v786
      %v793 = vsub.f32 %v620, %v786
      %v794 = vsub.f32 %v625, %v786
      %v795 = vsub.f32 %v630, %v786
      %v796 = vsub.f32 %v635, %v786
      %v797 = vsub.f32 %v640, %v786
      %v798 = vsub.f32 %v645, %v786
      %v799 = vsub.f32 %v650, %v786
      %v800 = vsub.f32 %v655, %v786
      %v801 = vsub.f32 %v660, %v786
      %v802 = vsub.f32 %v665, %v786
      %v803 = vsub.f32 %v670, %v786
      %v804 = vsub.f32 %v675, %v786
      %v805 = vsub.f32 %v680, %v786
      %v806 = vsub.f32 %v685, %v786
      %v807 = vsub.f32 %v690, %v786
      %v808 = vsub.f32 %v695, %v786
      %v809 = vsub.f32 %v700, %v786
      %v810 = vsub.f32 %v705, %v786
      %v811 = vsub.f32 %v710, %v786
      %v812 = vsub.f32 %v715, %v786
      %v813 = vsub.f32 %v720, %v786
      %v814 = vsub.f32 %v725, %v786
      %v815 = vsub.f32 %v730, %v786
      %v816 = vsub.f32 %v735, %v786
      %v817 = vsub.f32 %v740, %v786
      %v818 = vsub.f32 %v745, %v786
      %v819 = vmul.f32 %v787, %v787
      %v820 = vmul.f32 %v788, %v788
      %v821 = vmul.f32 %v789, %v789
      %v822 = vmul.f32 %v790, %v790
      %v823 = vmul.f32 %v791, %v791
      %v824 = vmul.f32 %v792, %v792
      %v825 = vmul.f32 %v793, %v793
      %v826 = vmul.f32 %v794, %v794
      %v827 = vmul.f32 %v795, %v795
      %v828 = vmul.f32 %v796, %v796
      %v829 = vmul.f32 %v797, %v797
      %v830 = vmul.f32 %v798, %v798
      %v831 = vmul.f32 %v799, %v799
      %v832 = vmul.f32 %v800, %v800
      %v833 = vmul.f32 %v801, %v801
      %v834 = vmul.f32 %v802, %v802
      %v835 = vmul.f32 %v803, %v803
      %v836 = vmul.f32 %v804, %v804
      %v837 = vmul.f32 %v805, %v805
      %v838 = vmul.f32 %v806, %v806
      %v839 = vmul.f32 %v807, %v807
      %v840 = vmul.f32 %v808, %v808
      %v841 = vmul.f32 %v809, %v809
      %v842 = vmul.f32 %v810, %v810
      %v843 = vmul.f32 %v811, %v811
      %v844 = vmul.f32 %v812, %v812
      %v845 = vmul.f32 %v813, %v813
      %v846 = vmul.f32 %v814, %v814
      %v847 = vmul.f32 %v815, %v815
      %v848 = vmul.f32 %v816, %v816
      %v849 = vmul.f32 %v817, %v817
      %v850 = vmul.f32 %v818, %v818
      %v851 = vadd.f32 %v819, %v820
      %v852 = vadd.f32 %v851, %v821
      %v853 = vadd.f32 %v852, %v822
      %v854 = vadd.f32 %v853, %v823
      %v855 = vadd.f32 %v854, %v824
      %v856 = vadd.f32 %v855, %v825
      %v857 = vadd.f32 %v856, %v826
      %v858 = vadd.f32 %v857, %v827
      %v859 = vadd.f32 %v858, %v828
      %v860 = vadd.f32 %v859, %v829
      %v861 = vadd.f32 %v860, %v830
      %v862 = vadd.f32 %v861, %v831
      %v863 = vadd.f32 %v862, %v832
      %v864 = vadd.f32 %v863, %v833
      %v865 = vadd.f32 %v864, %v834
      %v866 = vadd.f32 %v865, %v835
      %v867 = vadd.f32 %v866, %v836
      %v868 = vadd.f32 %v867, %v837
      %v869 = vadd.f32 %v868, %v838
      %v870 = vadd.f32 %v869, %v839
      %v871 = vadd.f32 %v870, %v840
      %v872 = vadd.f32 %v871, %v841
      %v873 = vadd.f32 %v872, %v842
      %v874 = vadd.f32 %v873, %v843
      %v875 = vadd.f32 %v874, %v844
      %v876 = vadd.f32 %v875, %v845
      %v877 = vadd.f32 %v876, %v846
      %v878 = vadd.f32 %v877, %v847
      %v879 = vadd.f32 %v878, %v848
      %v880 = vadd.f32 %v879, %v849
      %v881 = vadd.f32 %v880, %v850
      %v882 = vrot.slane %v881, 4
      %v883 = vadd.f32 %v881, %v882
      %v884 = vrot.slane %v883, 2
      %v885 = vadd.f32 %v883, %v884
      %v886 = vrot.slane %v885, 1
      %v887 = vadd.f32 %v885, %v886
      %v888 = vmul.f32 %v887, %v785
      %v889 = vld [vmem:[%s4] sm:$0x1]
      %v890 = vadd.f32 %v888, 1e-05
      %v891 = vrsqrt.pop %v890
      %v892 = vmul.f32 %v889, %v891
      %v894 = vlaneseq
      %v895 = vshrl.u32 %v894, 7
      %v896 = vsub.s32 0, %v895
      %v897 = vrot.slane %v892, %v896
      %v899 = vmul.f32 %v787, %v897
      %v900 = vmul.f32 %v788, %v897
      %v901 = vmul.f32 %v789, %v897
      %v902 = vmul.f32 %v790, %v897
      %v903 = vmul.f32 %v791, %v897
      %v904 = vmul.f32 %v792, %v897
      %v905 = vmul.f32 %v793, %v897
      %v906 = vmul.f32 %v794, %v897
      %v907 = vmul.f32 %v795, %v897
      %v908 = vmul.f32 %v796, %v897
      %v909 = vmul.f32 %v797, %v897
      %v910 = vmul.f32 %v798, %v897
      %v911 = vmul.f32 %v799, %v897
      %v912 = vmul.f32 %v800, %v897
      %v913 = vmul.f32 %v801, %v897
      %v914 = vmul.f32 %v802, %v897
      %v915 = vmul.f32 %v803, %v897
      %v916 = vmul.f32 %v804, %v897
      %v917 = vmul.f32 %v805, %v897
      %v918 = vmul.f32 %v806, %v897
      %v919 = vmul.f32 %v807, %v897
      %v920 = vmul.f32 %v808, %v897
      %v921 = vmul.f32 %v809, %v897
      %v922 = vmul.f32 %v810, %v897
      %v923 = vmul.f32 %v811, %v897
      %v924 = vmul.f32 %v812, %v897
      %v925 = vmul.f32 %v813, %v897
      %v926 = vmul.f32 %v814, %v897
      %v927 = vmul.f32 %v815, %v897
      %v928 = vmul.f32 %v816, %v897
      %v929 = vmul.f32 %v817, %v897
      %v930 = vmul.f32 %v818, %v897
      %v931 = vld [vmem:[%s5] sm:$0x1]
      %v933 = vlaneseq
      %v934 = vshrl.u32 %v933, 7
      %v935 = vsub.s32 0, %v934
      %v936 = vrot.slane %v931, %v935
      %v938 = vadd.f32 %v899, %v936
      %v939 = vadd.f32 %v900, %v936
      %v940 = vadd.f32 %v901, %v936
      %v941 = vadd.f32 %v902, %v936
      %v942 = vadd.f32 %v903, %v936
      %v943 = vadd.f32 %v904, %v936
      %v944 = vadd.f32 %v905, %v936
      %v945 = vadd.f32 %v906, %v936
      %v946 = vadd.f32 %v907, %v936
      %v947 = vadd.f32 %v908, %v936
      %v948 = vadd.f32 %v909, %v936
      %v949 = vadd.f32 %v910, %v936
      %v950 = vadd.f32 %v911, %v936
      %v951 = vadd.f32 %v912, %v936
      %v952 = vadd.f32 %v913, %v936
      %v953 = vadd.f32 %v914, %v936
      %v954 = vadd.f32 %v915, %v936
      %v955 = vadd.f32 %v916, %v936
      %v956 = vadd.f32 %v917, %v936
      %v957 = vadd.f32 %v918, %v936
      %v958 = vadd.f32 %v919, %v936
      %v959 = vadd.f32 %v920, %v936
      %v960 = vadd.f32 %v921, %v936
      %v961 = vadd.f32 %v922, %v936
      %v962 = vadd.f32 %v923, %v936
      %v963 = vadd.f32 %v924, %v936
      %v964 = vadd.f32 %v925, %v936
      %v965 = vadd.f32 %v926, %v936
      %v966 = vadd.f32 %v927, %v936
      %v967 = vadd.f32 %v928, %v936
      %v968 = vadd.f32 %v929, %v936
      %v969 = vadd.f32 %v930, %v936
      %v970 = vmax.f32 %v938, 0.0
      %v971 = vmax.f32 %v939, 0.0
      %v972 = vmax.f32 %v940, 0.0
      %v973 = vmax.f32 %v941, 0.0
      %v974 = vmax.f32 %v942, 0.0
      %v975 = vmax.f32 %v943, 0.0
      %v976 = vmax.f32 %v944, 0.0
      %v977 = vmax.f32 %v945, 0.0
      %v978 = vmax.f32 %v946, 0.0
      %v979 = vmax.f32 %v947, 0.0
      %v980 = vmax.f32 %v948, 0.0
      %v981 = vmax.f32 %v949, 0.0
      %v982 = vmax.f32 %v950, 0.0
      %v983 = vmax.f32 %v951, 0.0
      %v984 = vmax.f32 %v952, 0.0
      %v985 = vmax.f32 %v953, 0.0
      %v986 = vmax.f32 %v954, 0.0
      %v987 = vmax.f32 %v955, 0.0
      %v988 = vmax.f32 %v956, 0.0
      %v989 = vmax.f32 %v957, 0.0
      %v990 = vmax.f32 %v958, 0.0
      %v991 = vmax.f32 %v959, 0.0
      %v992 = vmax.f32 %v960, 0.0
      %v993 = vmax.f32 %v961, 0.0
      %v994 = vmax.f32 %v962, 0.0
      %v995 = vmax.f32 %v963, 0.0
      %v996 = vmax.f32 %v964, 0.0
      %v997 = vmax.f32 %v965, 0.0
      %v998 = vmax.f32 %v966, 0.0
      %v999 = vmax.f32 %v967, 0.0
      %v1000 = vmax.f32 %v968, 0.0
      %v1001 = vmax.f32 %v969, 0.0
      %v1002 = vpack.c.bf16 %v971, %v970
      %v1003 = vpack.c.bf16 %v973, %v972
      %v1004 = vpack.c.bf16 %v975, %v974
      %v1005 = vpack.c.bf16 %v977, %v976
      %v1006 = vpack.c.bf16 %v979, %v978
      %v1007 = vpack.c.bf16 %v981, %v980
      %v1008 = vpack.c.bf16 %v983, %v982
      %v1009 = vpack.c.bf16 %v985, %v984
      %v1010 = vpack.c.bf16 %v987, %v986
      %v1011 = vpack.c.bf16 %v989, %v988
      %v1012 = vpack.c.bf16 %v991, %v990
      %v1013 = vpack.c.bf16 %v993, %v992
      %v1014 = vpack.c.bf16 %v995, %v994
      %v1015 = vpack.c.bf16 %v997, %v996
      %v1016 = vpack.c.bf16 %v999, %v998
      %v1017 = vpack.c.bf16 %v1001, %v1000
      %v1034 = vunpack.c.l.b16 %v1002
      %v1035 = vunpack.c.h.b16 %v1002
      %v1036 = vunpack.c.l.b16 %v1003
      %v1037 = vunpack.c.h.b16 %v1003
      %v1038 = vunpack.c.l.b16 %v1004
      %v1039 = vunpack.c.h.b16 %v1004
      %v1040 = vunpack.c.l.b16 %v1005
      %v1041 = vunpack.c.h.b16 %v1005
      %v1042 = vunpack.c.l.b16 %v1006
      %v1043 = vunpack.c.h.b16 %v1006
      %v1044 = vunpack.c.l.b16 %v1007
      %v1045 = vunpack.c.h.b16 %v1007
      %v1046 = vunpack.c.l.b16 %v1008
      %v1047 = vunpack.c.h.b16 %v1008
      %v1048 = vunpack.c.l.b16 %v1009
      %v1049 = vunpack.c.h.b16 %v1009
      %v1050 = vunpack.c.l.b16 %v1010
      %v1051 = vunpack.c.h.b16 %v1010
      %v1052 = vunpack.c.l.b16 %v1011
      %v1053 = vunpack.c.h.b16 %v1011
      %v1054 = vunpack.c.l.b16 %v1012
      %v1055 = vunpack.c.h.b16 %v1012
      %v1056 = vunpack.c.l.b16 %v1013
      %v1057 = vunpack.c.h.b16 %v1013
      %v1058 = vunpack.c.l.b16 %v1014
      %v1059 = vunpack.c.h.b16 %v1014
      %v1060 = vunpack.c.l.b16 %v1015
      %v1061 = vunpack.c.h.b16 %v1015
      %v1062 = vunpack.c.l.b16 %v1016
      %v1063 = vunpack.c.h.b16 %v1016
      %v1064 = vunpack.c.l.b16 %v1017
      %v1065 = vunpack.c.h.b16 %v1017
      %v1066 = vpack.c.b16 %v1034, %v1034
      %v1067 = vpack.c.b16 %v1035, %v1035
      %v1068 = vpack.c.b16 %v1036, %v1036
      %v1069 = vpack.c.b16 %v1037, %v1037
      %v1070 = vpack.c.b16 %v1038, %v1038
      %v1071 = vpack.c.b16 %v1039, %v1039
      %v1072 = vpack.c.b16 %v1040, %v1040
      %v1073 = vpack.c.b16 %v1041, %v1041
      %v1074 = vpack.c.b16 %v1042, %v1042
      %v1075 = vpack.c.b16 %v1043, %v1043
      %v1076 = vpack.c.b16 %v1044, %v1044
      %v1077 = vpack.c.b16 %v1045, %v1045
      %v1078 = vpack.c.b16 %v1046, %v1046
      %v1079 = vpack.c.b16 %v1047, %v1047
      %v1080 = vpack.c.b16 %v1048, %v1048
      %v1081 = vpack.c.b16 %v1049, %v1049
      %v1082 = vpack.c.b16 %v1050, %v1050
      %v1083 = vpack.c.b16 %v1051, %v1051
      %v1084 = vpack.c.b16 %v1052, %v1052
      %v1085 = vpack.c.b16 %v1053, %v1053
      %v1086 = vpack.c.b16 %v1054, %v1054
      %v1087 = vpack.c.b16 %v1055, %v1055
      %v1088 = vpack.c.b16 %v1056, %v1056
      %v1089 = vpack.c.b16 %v1057, %v1057
      %v1090 = vpack.c.b16 %v1058, %v1058
      %v1091 = vpack.c.b16 %v1059, %v1059
      %v1092 = vpack.c.b16 %v1060, %v1060
      %v1093 = vpack.c.b16 %v1061, %v1061
      %v1094 = vpack.c.b16 %v1062, %v1062
      %v1095 = vpack.c.b16 %v1063, %v1063
      %v1096 = vpack.c.b16 %v1064, %v1064
      %v1097 = vpack.c.b16 %v1065, %v1065
      %1130 = vst [vmem:[#allocation2] sm:$0xf] %v1066
      %1131 = vst [vmem:[#allocation2 + $0x8] sm:$0xf] %v1067
      %1132 = vst [vmem:[#allocation2 + $0x10] sm:$0xf] %v1068
      %1133 = vst [vmem:[#allocation2 + $0x18] sm:$0xf] %v1069
      %1134 = vst [vmem:[#allocation2 + $0x20] sm:$0xf] %v1070
      %1135 = vst [vmem:[#allocation2 + $0x28] sm:$0xf] %v1071
      %1136 = vst [vmem:[#allocation2 + $0x30] sm:$0xf] %v1072
      %1137 = vst [vmem:[#allocation2 + $0x38] sm:$0xf] %v1073
      %1138 = vst [vmem:[#allocation2 + $0x40] sm:$0xf] %v1074
      %1139 = vst [vmem:[#allocation2 + $0x48] sm:$0xf] %v1075
      %1140 = vst [vmem:[#allocation2 + $0x50] sm:$0xf] %v1076
      %1141 = vst [vmem:[#allocation2 + $0x58] sm:$0xf] %v1077
      %1142 = vst [vmem:[#allocation2 + $0x60] sm:$0xf] %v1078
      %1143 = vst [vmem:[#allocation2 + $0x68] sm:$0xf] %v1079
      %1144 = vst [vmem:[#allocation2 + $0x70] sm:$0xf] %v1080
      %1145 = vst [vmem:[#allocation2 + $0x78] sm:$0xf] %v1081
      %1146 = vst [vmem:[#allocation2 + $0x80] sm:$0xf] %v1082
      %1147 = vst [vmem:[#allocation2 + $0x88] sm:$0xf] %v1083
      %1148 = vst [vmem:[#allocation2 + $0x90] sm:$0xf] %v1084
      %1149 = vst [vmem:[#allocation2 + $0x98] sm:$0xf] %v1085
      %1150 = vst [vmem:[#allocation2 + $0xa0] sm:$0xf] %v1086
      %1151 = vst [vmem:[#allocation2 + $0xa8] sm:$0xf] %v1087
      %1152 = vst [vmem:[#allocation2 + $0xb0] sm:$0xf] %v1088
      %1153 = vst [vmem:[#allocation2 + $0xb8] sm:$0xf] %v1089
      %1154 = vst [vmem:[#allocation2 + $0xc0] sm:$0xf] %v1090
      %1155 = vst [vmem:[#allocation2 + $0xc8] sm:$0xf] %v1091
      %1156 = vst [vmem:[#allocation2 + $0xd0] sm:$0xf] %v1092
      %1157 = vst [vmem:[#allocation2 + $0xd8] sm:$0xf] %v1093
      %1158 = vst [vmem:[#allocation2 + $0xe0] sm:$0xf] %v1094
      %1159 = vst [vmem:[#allocation2 + $0xe8] sm:$0xf] %v1095
      %1160 = vst [vmem:[#allocation2 + $0xf0] sm:$0xf] %v1096
      %1161 = vst [vmem:[#allocation2 + $0xf8] sm:$0xf] %v1097
      %1162 = vst [vmem:[#allocation2 + $0x4] sm:$0xf] 0
      %1163 = vst [vmem:[#allocation2 + $0xc] sm:$0xf] 0
      %1164 = vst [vmem:[#allocation2 + $0x14] sm:$0xf] 0
      %1165 = vst [vmem:[#allocation2 + $0x1c] sm:$0xf] 0
      %1166 = vst [vmem:[#allocation2 + $0x24] sm:$0xf] 0
      %1167 = vst [vmem:[#allocation2 + $0x2c] sm:$0xf] 0
      %1168 = vst [vmem:[#allocation2 + $0x34] sm:$0xf] 0
      %1169 = vst [vmem:[#allocation2 + $0x3c] sm:$0xf] 0
      %1170 = vst [vmem:[#allocation2 + $0x44] sm:$0xf] 0
      %1171 = vst [vmem:[#allocation2 + $0x4c] sm:$0xf] 0
      %1172 = vst [vmem:[#allocation2 + $0x54] sm:$0xf] 0
      %1173 = vst [vmem:[#allocation2 + $0x5c] sm:$0xf] 0
      %1174 = vst [vmem:[#allocation2 + $0x64] sm:$0xf] 0
      %1175 = vst [vmem:[#allocation2 + $0x6c] sm:$0xf] 0
      %1176 = vst [vmem:[#allocation2 + $0x74] sm:$0xf] 0
      %1177 = vst [vmem:[#allocation2 + $0x7c] sm:$0xf] 0
      %1178 = vst [vmem:[#allocation2 + $0x84] sm:$0xf] 0
      %1179 = vst [vmem:[#allocation2 + $0x8c] sm:$0xf] 0
      %1180 = vst [vmem:[#allocation2 + $0x94] sm:$0xf] 0
      %1181 = vst [vmem:[#allocation2 + $0x9c] sm:$0xf] 0
      %1182 = vst [vmem:[#allocation2 + $0xa4] sm:$0xf] 0
      %1183 = vst [vmem:[#allocation2 + $0xac] sm:$0xf] 0
      %1184 = vst [vmem:[#allocation2 + $0xb4] sm:$0xf] 0
      %1185 = vst [vmem:[#allocation2 + $0xbc] sm:$0xf] 0
      %1186 = vst [vmem:[#allocation2 + $0xc4] sm:$0xf] 0
      %1187 = vst [vmem:[#allocation2 + $0xcc] sm:$0xf] 0
      %1188 = vst [vmem:[#allocation2 + $0xd4] sm:$0xf] 0
      %1189 = vst [vmem:[#allocation2 + $0xdc] sm:$0xf] 0
      %1190 = vst [vmem:[#allocation2 + $0xe4] sm:$0xf] 0
      %1191 = vst [vmem:[#allocation2 + $0xec] sm:$0xf] 0
      %1192 = vst [vmem:[#allocation2 + $0xf4] sm:$0xf] 0
      %1193 = vst [vmem:[#allocation2 + $0xfc] sm:$0xf] 0
      %v1194 = vld [vmem:[%s376] sm:$0xff]
      %v1195 = vld [vmem:[%s376 + $0x8] sm:$0xff]
      %v1196 = vld [vmem:[%s376 + $0x10] sm:$0xff]
      %v1197 = vld [vmem:[%s376 + $0x18] sm:$0xff]
      %v1198 = vld [vmem:[%s376 + $0x20] sm:$0xff]
      %v1199 = vld [vmem:[%s376 + $0x28] sm:$0xff]
      %v1200 = vld [vmem:[%s376 + $0x30] sm:$0xff]
      %v1201 = vld [vmem:[%s376 + $0x38] sm:$0xff]
      %v1202 = vld [vmem:[%s376 + $0x40] sm:$0xff]
      %v1203 = vld [vmem:[%s376 + $0x48] sm:$0xff]
      %v1204 = vld [vmem:[%s376 + $0x50] sm:$0xff]
      %v1205 = vld [vmem:[%s376 + $0x58] sm:$0xff]
      %v1206 = vld [vmem:[%s376 + $0x60] sm:$0xff]
      %v1207 = vld [vmem:[%s376 + $0x68] sm:$0xff]
      %v1208 = vld [vmem:[%s376 + $0x70] sm:$0xff]
      %v1209 = vld [vmem:[%s376 + $0x78] sm:$0xff]
      %v1210 = vld [vmem:[%s376 + $0x80] sm:$0xff]
      %v1211 = vld [vmem:[%s376 + $0x88] sm:$0xff]
      %v1212 = vld [vmem:[%s376 + $0x90] sm:$0xff]
      %v1213 = vld [vmem:[%s376 + $0x98] sm:$0xff]
      %v1214 = vld [vmem:[%s376 + $0xa0] sm:$0xff]
      %v1215 = vld [vmem:[%s376 + $0xa8] sm:$0xff]
      %v1216 = vld [vmem:[%s376 + $0xb0] sm:$0xff]
      %v1217 = vld [vmem:[%s376 + $0xb8] sm:$0xff]
      %v1218 = vld [vmem:[%s376 + $0xc0] sm:$0xff]
      %v1219 = vld [vmem:[%s376 + $0xc8] sm:$0xff]
      %v1220 = vld [vmem:[%s376 + $0xd0] sm:$0xff]
      %v1221 = vld [vmem:[%s376 + $0xd8] sm:$0xff]
      %v1222 = vld [vmem:[%s376 + $0xe0] sm:$0xff]
      %v1223 = vld [vmem:[%s376 + $0xe8] sm:$0xff]
      %v1224 = vld [vmem:[%s376 + $0xf0] sm:$0xff]
      %v1225 = vld [vmem:[%s376 + $0xf8] sm:$0xff]
      %v1226 = vpack.c.bf16 %v1195, %v1194
      %v1227 = vpack.c.bf16 %v1197, %v1196
      %v1228 = vpack.c.bf16 %v1199, %v1198
      %v1229 = vpack.c.bf16 %v1201, %v1200
      %v1230 = vpack.c.bf16 %v1203, %v1202
      %v1231 = vpack.c.bf16 %v1205, %v1204
      %v1232 = vpack.c.bf16 %v1207, %v1206
      %v1233 = vpack.c.bf16 %v1209, %v1208
      %v1234 = vpack.c.bf16 %v1211, %v1210
      %v1235 = vpack.c.bf16 %v1213, %v1212
      %v1236 = vpack.c.bf16 %v1215, %v1214
      %v1237 = vpack.c.bf16 %v1217, %v1216
      %v1238 = vpack.c.bf16 %v1219, %v1218
      %v1239 = vpack.c.bf16 %v1221, %v1220
      %v1240 = vpack.c.bf16 %v1223, %v1222
      %v1241 = vpack.c.bf16 %v1225, %v1224
      %v1258 = vunpack.c.l.b16 %v1226
      %v1259 = vunpack.c.h.b16 %v1226
      %v1260 = vunpack.c.l.b16 %v1227
      %v1261 = vunpack.c.h.b16 %v1227
      %v1262 = vunpack.c.l.b16 %v1228
      %v1263 = vunpack.c.h.b16 %v1228
      %v1264 = vunpack.c.l.b16 %v1229
      %v1265 = vunpack.c.h.b16 %v1229
      %v1266 = vunpack.c.l.b16 %v1230
      %v1267 = vunpack.c.h.b16 %v1230
      %v1268 = vunpack.c.l.b16 %v1231
      %v1269 = vunpack.c.h.b16 %v1231
      %v1270 = vunpack.c.l.b16 %v1232
      %v1271 = vunpack.c.h.b16 %v1232
      %v1272 = vunpack.c.l.b16 %v1233
      %v1273 = vunpack.c.h.b16 %v1233
      %v1274 = vunpack.c.l.b16 %v1234
      %v1275 = vunpack.c.h.b16 %v1234
      %v1276 = vunpack.c.l.b16 %v1235
      %v1277 = vunpack.c.h.b16 %v1235
      %v1278 = vunpack.c.l.b16 %v1236
      %v1279 = vunpack.c.h.b16 %v1236
      %v1280 = vunpack.c.l.b16 %v1237
      %v1281 = vunpack.c.h.b16 %v1237
      %v1282 = vunpack.c.l.b16 %v1238
      %v1283 = vunpack.c.h.b16 %v1238
      %v1284 = vunpack.c.l.b16 %v1239
      %v1285 = vunpack.c.h.b16 %v1239
      %v1286 = vunpack.c.l.b16 %v1240
      %v1287 = vunpack.c.h.b16 %v1240
      %v1288 = vunpack.c.l.b16 %v1241
      %v1289 = vunpack.c.h.b16 %v1241
      %v1290 = vpack.c.b16 %v1258, %v1258
      %v1291 = vpack.c.b16 %v1259, %v1259
      %v1292 = vpack.c.b16 %v1260, %v1260
      %v1293 = vpack.c.b16 %v1261, %v1261
      %v1294 = vpack.c.b16 %v1262, %v1262
      %v1295 = vpack.c.b16 %v1263, %v1263
      %v1296 = vpack.c.b16 %v1264, %v1264
      %v1297 = vpack.c.b16 %v1265, %v1265
      %v1298 = vpack.c.b16 %v1266, %v1266
      %v1299 = vpack.c.b16 %v1267, %v1267
      %v1300 = vpack.c.b16 %v1268, %v1268
      %v1301 = vpack.c.b16 %v1269, %v1269
      %v1302 = vpack.c.b16 %v1270, %v1270
      %v1303 = vpack.c.b16 %v1271, %v1271
      %v1304 = vpack.c.b16 %v1272, %v1272
      %v1305 = vpack.c.b16 %v1273, %v1273
      %v1306 = vpack.c.b16 %v1274, %v1274
      %v1307 = vpack.c.b16 %v1275, %v1275
      %v1308 = vpack.c.b16 %v1276, %v1276
      %v1309 = vpack.c.b16 %v1277, %v1277
      %v1310 = vpack.c.b16 %v1278, %v1278
      %v1311 = vpack.c.b16 %v1279, %v1279
      %v1312 = vpack.c.b16 %v1280, %v1280
      %v1313 = vpack.c.b16 %v1281, %v1281
      %v1314 = vpack.c.b16 %v1282, %v1282
      %v1315 = vpack.c.b16 %v1283, %v1283
      %v1316 = vpack.c.b16 %v1284, %v1284
      %v1317 = vpack.c.b16 %v1285, %v1285
      %v1318 = vpack.c.b16 %v1286, %v1286
      %v1319 = vpack.c.b16 %v1287, %v1287
      %v1320 = vpack.c.b16 %v1288, %v1288
      %v1321 = vpack.c.b16 %v1289, %v1289
      %vm1354 = vcmask 60416
      %1355 = vst.msk [vmem:[#allocation2 + $0x4] sm:$0xf] %vm1354, %v1290
      %1356 = vst.msk [vmem:[#allocation2 + $0xc] sm:$0xf] %vm1354, %v1291
      %1357 = vst.msk [vmem:[#allocation2 + $0x14] sm:$0xf] %vm1354, %v1292
      %1358 = vst.msk [vmem:[#allocation2 + $0x1c] sm:$0xf] %vm1354, %v1293
      %1359 = vst.msk [vmem:[#allocation2 + $0x24] sm:$0xf] %vm1354, %v1294
      %1360 = vst.msk [vmem:[#allocation2 + $0x2c] sm:$0xf] %vm1354, %v1295
      %1361 = vst.msk [vmem:[#allocation2 + $0x34] sm:$0xf] %vm1354, %v1296
      %1362 = vst.msk [vmem:[#allocation2 + $0x3c] sm:$0xf] %vm1354, %v1297
      %1363 = vst.msk [vmem:[#allocation2 + $0x44] sm:$0xf] %vm1354, %v1298
      %1364 = vst.msk [vmem:[#allocation2 + $0x4c] sm:$0xf] %vm1354, %v1299
      %1365 = vst.msk [vmem:[#allocation2 + $0x54] sm:$0xf] %vm1354, %v1300
      %1366 = vst.msk [vmem:[#allocation2 + $0x5c] sm:$0xf] %vm1354, %v1301
      %1367 = vst.msk [vmem:[#allocation2 + $0x64] sm:$0xf] %vm1354, %v1302
      %1368 = vst.msk [vmem:[#allocation2 + $0x6c] sm:$0xf] %vm1354, %v1303
      %1369 = vst.msk [vmem:[#allocation2 + $0x74] sm:$0xf] %vm1354, %v1304
      %1370 = vst.msk [vmem:[#allocation2 + $0x7c] sm:$0xf] %vm1354, %v1305
      %1371 = vst.msk [vmem:[#allocation2 + $0x84] sm:$0xf] %vm1354, %v1306
      %1372 = vst.msk [vmem:[#allocation2 + $0x8c] sm:$0xf] %vm1354, %v1307
      %1373 = vst.msk [vmem:[#allocation2 + $0x94] sm:$0xf] %vm1354, %v1308
      %1374 = vst.msk [vmem:[#allocation2 + $0x9c] sm:$0xf] %vm1354, %v1309
      %1375 = vst.msk [vmem:[#allocation2 + $0xa4] sm:$0xf] %vm1354, %v1310
      %1376 = vst.msk [vmem:[#allocation2 + $0xac] sm:$0xf] %vm1354, %v1311
      %1377 = vst.msk [vmem:[#allocation2 + $0xb4] sm:$0xf] %vm1354, %v1312
      %1378 = vst.msk [vmem:[#allocation2 + $0xbc] sm:$0xf] %vm1354, %v1313
      %1379 = vst.msk [vmem:[#allocation2 + $0xc4] sm:$0xf] %vm1354, %v1314
      %1380 = vst.msk [vmem:[#allocation2 + $0xcc] sm:$0xf] %vm1354, %v1315
      %1381 = vst.msk [vmem:[#allocation2 + $0xd4] sm:$0xf] %vm1354, %v1316
      %1382 = vst.msk [vmem:[#allocation2 + $0xdc] sm:$0xf] %vm1354, %v1317
      %1383 = vst.msk [vmem:[#allocation2 + $0xe4] sm:$0xf] %vm1354, %v1318
      %1384 = vst.msk [vmem:[#allocation2 + $0xec] sm:$0xf] %vm1354, %v1319
      %1385 = vst.msk [vmem:[#allocation2 + $0xf4] sm:$0xf] %vm1354, %v1320
      %1386 = vst.msk [vmem:[#allocation2 + $0xfc] sm:$0xf] %vm1354, %v1321
      %v1387 = vld [vmem:[#allocation2] sm:$0xff]
      %v1388 = vld [vmem:[#allocation2 + $0x8] sm:$0xff]
      %v1389 = vld [vmem:[#allocation2 + $0x10] sm:$0xff]
      %v1390 = vld [vmem:[#allocation2 + $0x18] sm:$0xff]
      %v1391 = vld [vmem:[#allocation2 + $0x20] sm:$0xff]
      %v1392 = vld [vmem:[#allocation2 + $0x28] sm:$0xff]
      %v1393 = vld [vmem:[#allocation2 + $0x30] sm:$0xff]
      %v1394 = vld [vmem:[#allocation2 + $0x38] sm:$0xff]
      %v1395 = vld [vmem:[#allocation2 + $0x40] sm:$0xff]
      %v1396 = vld [vmem:[#allocation2 + $0x48] sm:$0xff]
      %v1397 = vld [vmem:[#allocation2 + $0x50] sm:$0xff]
      %v1398 = vld [vmem:[#allocation2 + $0x58] sm:$0xff]
      %v1399 = vld [vmem:[#allocation2 + $0x60] sm:$0xff]
      %v1400 = vld [vmem:[#allocation2 + $0x68] sm:$0xff]
      %v1401 = vld [vmem:[#allocation2 + $0x70] sm:$0xff]
      %v1402 = vld [vmem:[#allocation2 + $0x78] sm:$0xff]
      %v1403 = vld [vmem:[#allocation2 + $0x80] sm:$0xff]
      %v1404 = vld [vmem:[#allocation2 + $0x88] sm:$0xff]
      %v1405 = vld [vmem:[#allocation2 + $0x90] sm:$0xff]
      %v1406 = vld [vmem:[#allocation2 + $0x98] sm:$0xff]
      %v1407 = vld [vmem:[#allocation2 + $0xa0] sm:$0xff]
      %v1408 = vld [vmem:[#allocation2 + $0xa8] sm:$0xff]
      %v1409 = vld [vmem:[#allocation2 + $0xb0] sm:$0xff]
      %v1410 = vld [vmem:[#allocation2 + $0xb8] sm:$0xff]
      %v1411 = vld [vmem:[#allocation2 + $0xc0] sm:$0xff]
      %v1412 = vld [vmem:[#allocation2 + $0xc8] sm:$0xff]
      %v1413 = vld [vmem:[#allocation2 + $0xd0] sm:$0xff]
      %v1414 = vld [vmem:[#allocation2 + $0xd8] sm:$0xff]
      %v1415 = vld [vmem:[#allocation2 + $0xe0] sm:$0xff]
      %v1416 = vld [vmem:[#allocation2 + $0xe8] sm:$0xff]
      %v1417 = vld [vmem:[#allocation2 + $0xf0] sm:$0xff]
      %v1418 = vld [vmem:[#allocation2 + $0xf8] sm:$0xff]
      %v1419 = vld [vmem:[%s6] sm:$0xf]
      %v1420 = vld [vmem:[%s6 + $0x4] sm:$0xf]
      %v1421 = vld [vmem:[%s6 + $0x8] sm:$0xf]
      %v1422 = vld [vmem:[%s6 + $0xc] sm:$0xf]
      %v1423 = vld [vmem:[%s6 + $0x10] sm:$0xf]
      %v1424 = vld [vmem:[%s6 + $0x14] sm:$0xf]
      %v1425 = vld [vmem:[%s6 + $0x18] sm:$0xf]
      %v1426 = vld [vmem:[%s6 + $0x1c] sm:$0xf]
      %v1427 = vld [vmem:[%s6 + $0x20] sm:$0xf]
      %v1428 = vld [vmem:[%s6 + $0x24] sm:$0xf]
      %v1429 = vld [vmem:[%s6 + $0x28] sm:$0xf]
      %v1430 = vld [vmem:[%s6 + $0x2c] sm:$0xf]
      %v1431 = vld [vmem:[%s6 + $0x30] sm:$0xf]
      %v1432 = vld [vmem:[%s6 + $0x34] sm:$0xf]
      %v1433 = vld [vmem:[%s6 + $0x38] sm:$0xf]
      %v1434 = vld [vmem:[%s6 + $0x3c] sm:$0xf]
      %v1435 = vld [vmem:[%s6 + $0x40] sm:$0xf]
      %v1436 = vld [vmem:[%s6 + $0x44] sm:$0xf]
      %v1437 = vld [vmem:[%s6 + $0x48] sm:$0xf]
      %v1438 = vld [vmem:[%s6 + $0x4c] sm:$0xf]
      %v1439 = vld [vmem:[%s6 + $0x50] sm:$0xf]
      %v1440 = vld [vmem:[%s6 + $0x54] sm:$0xf]
      %v1441 = vld [vmem:[%s6 + $0x58] sm:$0xf]
      %v1442 = vld [vmem:[%s6 + $0x5c] sm:$0xf]
      %v1443 = vld [vmem:[%s6 + $0x60] sm:$0xf]
      %v1444 = vld [vmem:[%s6 + $0x64] sm:$0xf]
      %v1445 = vld [vmem:[%s6 + $0x68] sm:$0xf]
      %v1446 = vld [vmem:[%s6 + $0x6c] sm:$0xf]
      %v1447 = vld [vmem:[%s6 + $0x70] sm:$0xf]
      %v1448 = vld [vmem:[%s6 + $0x74] sm:$0xf]
      %v1449 = vld [vmem:[%s6 + $0x78] sm:$0xf]
      %v1450 = vld [vmem:[%s6 + $0x7c] sm:$0xf]
      %v1451 = vld [vmem:[%s7] sm:$0x1]
      %v1453 = vlaneseq
      %v1454 = vshrl.u32 %v1453, 7
      %v1455 = vsub.s32 0, %v1454
      %v1456 = vrot.slane %v1451, %v1455
      %v1490 = vunpack.c.l.b16 %v1387
      %v1491 = vunpack.c.h.b16 %v1387
      %v1492 = vunpack.c.l.b16 %v1388
      %v1493 = vunpack.c.h.b16 %v1388
      %v1494 = vunpack.c.l.b16 %v1389
      %v1495 = vunpack.c.h.b16 %v1389
      %v1496 = vunpack.c.l.b16 %v1390
      %v1497 = vunpack.c.h.b16 %v1390
      %v1498 = vunpack.c.l.b16 %v1391
      %v1499 = vunpack.c.h.b16 %v1391
      %v1500 = vunpack.c.l.b16 %v1392
      %v1501 = vunpack.c.h.b16 %v1392
      %v1502 = vunpack.c.l.b16 %v1393
      %v1503 = vunpack.c.h.b16 %v1393
      %v1504 = vunpack.c.l.b16 %v1394
      %v1505 = vunpack.c.h.b16 %v1394
      %v1506 = vunpack.c.l.b16 %v1395
      %v1507 = vunpack.c.h.b16 %v1395
      %v1508 = vunpack.c.l.b16 %v1396
      %v1509 = vunpack.c.h.b16 %v1396
      %v1510 = vunpack.c.l.b16 %v1397
      %v1511 = vunpack.c.h.b16 %v1397
      %v1512 = vunpack.c.l.b16 %v1398
      %v1513 = vunpack.c.h.b16 %v1398
      %v1514 = vunpack.c.l.b16 %v1399
      %v1515 = vunpack.c.h.b16 %v1399
      %v1516 = vunpack.c.l.b16 %v1400
      %v1517 = vunpack.c.h.b16 %v1400
      %v1518 = vunpack.c.l.b16 %v1401
      %v1519 = vunpack.c.h.b16 %v1401
      %v1520 = vunpack.c.l.b16 %v1402
      %v1521 = vunpack.c.h.b16 %v1402
      %v1522 = vunpack.c.l.b16 %v1403
      %v1523 = vunpack.c.h.b16 %v1403
      %v1524 = vunpack.c.l.b16 %v1404
      %v1525 = vunpack.c.h.b16 %v1404
      %v1526 = vunpack.c.l.b16 %v1405
      %v1527 = vunpack.c.h.b16 %v1405
      %v1528 = vunpack.c.l.b16 %v1406
      %v1529 = vunpack.c.h.b16 %v1406
      %v1530 = vunpack.c.l.b16 %v1407
      %v1531 = vunpack.c.h.b16 %v1407
      %v1532 = vunpack.c.l.b16 %v1408
      %v1533 = vunpack.c.h.b16 %v1408
      %v1534 = vunpack.c.l.b16 %v1409
      %v1535 = vunpack.c.h.b16 %v1409
      %v1536 = vunpack.c.l.b16 %v1410
      %v1537 = vunpack.c.h.b16 %v1410
      %v1538 = vunpack.c.l.b16 %v1411
      %v1539 = vunpack.c.h.b16 %v1411
      %v1540 = vunpack.c.l.b16 %v1412
      %v1541 = vunpack.c.h.b16 %v1412
      %v1542 = vunpack.c.l.b16 %v1413
      %v1543 = vunpack.c.h.b16 %v1413
      %v1544 = vunpack.c.l.b16 %v1414
      %v1545 = vunpack.c.h.b16 %v1414
      %v1546 = vunpack.c.l.b16 %v1415
      %v1547 = vunpack.c.h.b16 %v1415
      %v1548 = vunpack.c.l.b16 %v1416
      %v1549 = vunpack.c.h.b16 %v1416
      %v1550 = vunpack.c.l.b16 %v1417
      %v1551 = vunpack.c.h.b16 %v1417
      %v1552 = vunpack.c.l.b16 %v1418
      %v1553 = vunpack.c.h.b16 %v1418
      %v1554 = vpack.c.b16 %v1492, %v1490
      %v1555 = vpack.c.b16 %v1493, %v1491
      %v1556 = vpack.c.b16 %v1496, %v1494
      %v1557 = vpack.c.b16 %v1497, %v1495
      %v1558 = vpack.c.b16 %v1500, %v1498
      %v1559 = vpack.c.b16 %v1501, %v1499
      %v1560 = vpack.c.b16 %v1504, %v1502
      %v1561 = vpack.c.b16 %v1505, %v1503
      %v1562 = vpack.c.b16 %v1508, %v1506
      %v1563 = vpack.c.b16 %v1509, %v1507
      %v1564 = vpack.c.b16 %v1512, %v1510
      %v1565 = vpack.c.b16 %v1513, %v1511
      %v1566 = vpack.c.b16 %v1516, %v1514
      %v1567 = vpack.c.b16 %v1517, %v1515
      %v1568 = vpack.c.b16 %v1520, %v1518
      %v1569 = vpack.c.b16 %v1521, %v1519
      %v1570 = vpack.c.b16 %v1524, %v1522
      %v1571 = vpack.c.b16 %v1525, %v1523
      %v1572 = vpack.c.b16 %v1528, %v1526
      %v1573 = vpack.c.b16 %v1529, %v1527
      %v1574 = vpack.c.b16 %v1532, %v1530
      %v1575 = vpack.c.b16 %v1533, %v1531
      %v1576 = vpack.c.b16 %v1536, %v1534
      %v1577 = vpack.c.b16 %v1537, %v1535
      %v1578 = vpack.c.b16 %v1540, %v1538
      %v1579 = vpack.c.b16 %v1541, %v1539
      %v1580 = vpack.c.b16 %v1544, %v1542
      %v1581 = vpack.c.b16 %v1545, %v1543
      %v1582 = vpack.c.b16 %v1548, %v1546
      %v1583 = vpack.c.b16 %v1549, %v1547
      %v1584 = vpack.c.b16 %v1552, %v1550
      %v1585 = vpack.c.b16 %v1553, %v1551
      %v1650 = vunpack.c.l.b16 %v1419
      %v1651 = vunpack.c.l.b16 %v1420
      %v1652 = vunpack.c.l.b16 %v1421
      %v1653 = vunpack.c.l.b16 %v1422
      %v1654 = vunpack.c.l.b16 %v1423
      %v1655 = vunpack.c.l.b16 %v1424
      %v1656 = vunpack.c.l.b16 %v1425
      %v1657 = vunpack.c.l.b16 %v1426
      %v1658 = vunpack.c.l.b16 %v1427
      %v1659 = vunpack.c.l.b16 %v1428
      %v1660 = vunpack.c.l.b16 %v1429
      %v1661 = vunpack.c.l.b16 %v1430
      %v1662 = vunpack.c.l.b16 %v1431
      %v1663 = vunpack.c.l.b16 %v1432
      %v1664 = vunpack.c.l.b16 %v1433
      %v1665 = vunpack.c.l.b16 %v1434
      %v1666 = vunpack.c.l.b16 %v1435
      %v1667 = vunpack.c.l.b16 %v1436
      %v1668 = vunpack.c.l.b16 %v1437
      %v1669 = vunpack.c.l.b16 %v1438
      %v1670 = vunpack.c.l.b16 %v1439
      %v1671 = vunpack.c.l.b16 %v1440
      %v1672 = vunpack.c.l.b16 %v1441
      %v1673 = vunpack.c.l.b16 %v1442
      %v1674 = vunpack.c.l.b16 %v1443
      %v1675 = vunpack.c.l.b16 %v1444
      %v1676 = vunpack.c.l.b16 %v1445
      %v1677 = vunpack.c.l.b16 %v1446
      %v1678 = vunpack.c.l.b16 %v1447
      %v1679 = vunpack.c.l.b16 %v1448
      %v1680 = vunpack.c.l.b16 %v1449
      %v1681 = vunpack.c.l.b16 %v1450
      %v1682 = vpack.c.b16 %v1651, %v1650
      %v1683 = vpack.c.b16 %v1653, %v1652
      %v1684 = vpack.c.b16 %v1655, %v1654
      %v1685 = vpack.c.b16 %v1657, %v1656
      %v1686 = vpack.c.b16 %v1659, %v1658
      %v1687 = vpack.c.b16 %v1661, %v1660
      %v1688 = vpack.c.b16 %v1663, %v1662
      %v1689 = vpack.c.b16 %v1665, %v1664
      %v1690 = vpack.c.b16 %v1667, %v1666
      %v1691 = vpack.c.b16 %v1669, %v1668
      %v1692 = vpack.c.b16 %v1671, %v1670
      %v1693 = vpack.c.b16 %v1673, %v1672
      %v1694 = vpack.c.b16 %v1675, %v1674
      %v1695 = vpack.c.b16 %v1677, %v1676
      %v1696 = vpack.c.b16 %v1679, %v1678
      %v1697 = vpack.c.b16 %v1681, %v1680
      %1714 = vmatprep.subr.bf16.mxu0 0
      %1715 = vmatpush1.bf16.msra.mxu0 %v1689
      %1716 = vmatprep.subr.bf16.mxu0 0
      %1717 = vmatpush1.bf16.msra.mxu0 %v1688
      %1718 = vmatprep.subr.bf16.mxu0 0
      %1719 = vmatpush1.bf16.msra.mxu0 %v1687
      %1720 = vmatprep.subr.bf16.mxu0 0
      %1721 = vmatpush1.bf16.msra.mxu0 %v1686
      %1722 = vmatprep.subr.bf16.mxu0 0
      %1723 = vmatpush1.bf16.msra.mxu0 %v1685
      %1724 = vmatprep.subr.bf16.mxu0 0
      %1725 = vmatpush1.bf16.msra.mxu0 %v1684
      %1726 = vmatprep.subr.bf16.mxu0 0
      %1727 = vmatpush1.bf16.msra.mxu0 %v1683
      %1728 = vmatprep.subr.bf16.mxu0 0
      %1729 = vmatpush1.bf16.msra.mxu0 %v1682
      %1730 = vmatprep.subr.bf16.mxu0 0
      %1731 = vmatpush2.bf16.msra.mxu0 %v1697
      %1732 = vmatprep.subr.bf16.mxu0 0
      %1733 = vmatpush2.bf16.msra.mxu0 %v1696
      %1734 = vmatprep.subr.bf16.mxu0 0
      %1735 = vmatpush2.bf16.msra.mxu0 %v1695
      %1736 = vmatprep.subr.bf16.mxu0 0
      %1737 = vmatpush2.bf16.msra.mxu0 %v1694
      %1738 = vmatprep.subr.bf16.mxu0 0
      %1739 = vmatpush2.bf16.msra.mxu0 %v1693
      %1740 = vmatprep.subr.bf16.mxu0 0
      %1741 = vmatpush2.bf16.msra.mxu0 %v1692
      %1742 = vmatprep.subr.bf16.mxu0 0
      %1743 = vmatpush2.bf16.msra.mxu0 %v1691
      %1744 = vmatprep.subr.bf16.mxu0 0
      %1745 = vmatpush2.bf16.msra.mxu0 %v1690
      %1746 = vmatprep.mubr.bf16.mxu0 %v1555
      %1747 = vmatmul.mubr.bf16.gmra.mxu0 %v1554
      %v1748 = vpop.f32.mrf.mxu0
      %v1749 = vadd.f32 %v1456, %v1748
      %v1750 = vpop.f32.mrf.mxu0
      %v1751 = vpop.f32.mrf.mxu0
      %v1752 = vadd.f32 %v1456, %v1751
      %v1753 = vpop.f32.mrf.mxu0
      %1754 = vmatprep.mubr.bf16.mxu0 %v1557
      %1755 = vmatmul.mubr.bf16.gmra.mxu0 %v1556
      %v1756 = vpop.f32.mrf.mxu0
      %v1757 = vadd.f32 %v1456, %v1756
      %v1758 = vpop.f32.mrf.mxu0
      %v1759 = vpop.f32.mrf.mxu0
      %v1760 = vadd.f32 %v1456, %v1759
      %v1761 = vpop.f32.mrf.mxu0
      %1762 = vmatprep.mubr.bf16.mxu0 %v1559
      %1763 = vmatmul.mubr.bf16.gmra.mxu0 %v1558
      %v1764 = vpop.f32.mrf.mxu0
      %v1765 = vadd.f32 %v1456, %v1764
      %v1766 = vpop.f32.mrf.mxu0
      %v1767 = vpop.f32.mrf.mxu0
      %v1768 = vadd.f32 %v1456, %v1767
      %v1769 = vpop.f32.mrf.mxu0
      %1770 = vmatprep.mubr.bf16.mxu0 %v1561
      %1771 = vmatmul.mubr.bf16.gmra.mxu0 %v1560
      %v1772 = vpop.f32.mrf.mxu0
      %v1773 = vadd.f32 %v1456, %v1772
      %v1774 = vpop.f32.mrf.mxu0
      %v1775 = vpop.f32.mrf.mxu0
      %v1776 = vadd.f32 %v1456, %v1775
      %v1777 = vpop.f32.mrf.mxu0
      %1778 = vmatprep.mubr.bf16.mxu0 %v1563
      %1779 = vmatmul.mubr.bf16.gmra.mxu0 %v1562
      %v1780 = vpop.f32.mrf.mxu0
      %v1781 = vadd.f32 %v1456, %v1780
      %v1782 = vpop.f32.mrf.mxu0
      %v1783 = vpop.f32.mrf.mxu0
      %v1784 = vadd.f32 %v1456, %v1783
      %v1785 = vpop.f32.mrf.mxu0
      %1786 = vmatprep.mubr.bf16.mxu0 %v1565
      %1787 = vmatmul.mubr.bf16.gmra.mxu0 %v1564
      %v1788 = vpop.f32.mrf.mxu0
      %v1789 = vadd.f32 %v1456, %v1788
      %v1790 = vpop.f32.mrf.mxu0
      %v1791 = vpop.f32.mrf.mxu0
      %v1792 = vadd.f32 %v1456, %v1791
      %v1793 = vpop.f32.mrf.mxu0
      %1794 = vmatprep.mubr.bf16.mxu0 %v1567
      %1795 = vmatmul.mubr.bf16.gmra.mxu0 %v1566
      %v1796 = vpop.f32.mrf.mxu0
      %v1797 = vadd.f32 %v1456, %v1796
      %v1798 = vpop.f32.mrf.mxu0
      %v1799 = vpop.f32.mrf.mxu0
      %v1800 = vadd.f32 %v1456, %v1799
      %v1801 = vpop.f32.mrf.mxu0
      %1802 = vmatprep.mubr.bf16.mxu0 %v1569
      %1803 = vmatmul.mubr.bf16.gmra.mxu0 %v1568
      %v1804 = vpop.f32.mrf.mxu0
      %v1805 = vadd.f32 %v1456, %v1804
      %v1806 = vpop.f32.mrf.mxu0
      %v1807 = vpop.f32.mrf.mxu0
      %v1808 = vadd.f32 %v1456, %v1807
      %v1809 = vpop.f32.mrf.mxu0
      %1810 = vmatprep.mubr.bf16.mxu0 %v1571
      %1811 = vmatmul.mubr.bf16.gmra.mxu0 %v1570
      %v1812 = vpop.f32.mrf.mxu0
      %v1813 = vadd.f32 %v1456, %v1812
      %v1814 = vpop.f32.mrf.mxu0
      %v1815 = vpop.f32.mrf.mxu0
      %v1816 = vadd.f32 %v1456, %v1815
      %v1817 = vpop.f32.mrf.mxu0
      %1818 = vmatprep.mubr.bf16.mxu0 %v1573
      %1819 = vmatmul.mubr.bf16.gmra.mxu0 %v1572
      %v1820 = vpop.f32.mrf.mxu0
      %v1821 = vadd.f32 %v1456, %v1820
      %v1822 = vpop.f32.mrf.mxu0
      %v1823 = vpop.f32.mrf.mxu0
      %v1824 = vadd.f32 %v1456, %v1823
      %v1825 = vpop.f32.mrf.mxu0
      %1826 = vmatprep.mubr.bf16.mxu0 %v1575
      %1827 = vmatmul.mubr.bf16.gmra.mxu0 %v1574
      %v1828 = vpop.f32.mrf.mxu0
      %v1829 = vadd.f32 %v1456, %v1828
      %v1830 = vpop.f32.mrf.mxu0
      %v1831 = vpop.f32.mrf.mxu0
      %v1832 = vadd.f32 %v1456, %v1831
      %v1833 = vpop.f32.mrf.mxu0
      %1834 = vmatprep.mubr.bf16.mxu0 %v1577
      %1835 = vmatmul.mubr.bf16.gmra.mxu0 %v1576
      %v1836 = vpop.f32.mrf.mxu0
      %v1837 = vadd.f32 %v1456, %v1836
      %v1838 = vpop.f32.mrf.mxu0
      %v1839 = vpop.f32.mrf.mxu0
      %v1840 = vadd.f32 %v1456, %v1839
      %v1841 = vpop.f32.mrf.mxu0
      %1842 = vmatprep.mubr.bf16.mxu0 %v1579
      %1843 = vmatmul.mubr.bf16.gmra.mxu0 %v1578
      %v1844 = vpop.f32.mrf.mxu0
      %v1845 = vadd.f32 %v1456, %v1844
      %v1846 = vpop.f32.mrf.mxu0
      %v1847 = vpop.f32.mrf.mxu0
      %v1848 = vadd.f32 %v1456, %v1847
      %v1849 = vpop.f32.mrf.mxu0
      %1850 = vmatprep.mubr.bf16.mxu0 %v1581
      %1851 = vmatmul.mubr.bf16.gmra.mxu0 %v1580
      %v1852 = vpop.f32.mrf.mxu0
      %v1853 = vadd.f32 %v1456, %v1852
      %v1854 = vpop.f32.mrf.mxu0
      %v1855 = vpop.f32.mrf.mxu0
      %v1856 = vadd.f32 %v1456, %v1855
      %v1857 = vpop.f32.mrf.mxu0
      %1858 = vmatprep.mubr.bf16.mxu0 %v1583
      %1859 = vmatmul.mubr.bf16.gmra.mxu0 %v1582
      %v1860 = vpop.f32.mrf.mxu0
      %v1861 = vadd.f32 %v1456, %v1860
      %v1862 = vpop.f32.mrf.mxu0
      %v1863 = vpop.f32.mrf.mxu0
      %v1864 = vadd.f32 %v1456, %v1863
      %v1865 = vpop.f32.mrf.mxu0
      %1866 = vmatprep.mubr.bf16.mxu0 %v1585
      %1867 = vmatmul.mubr.bf16.gmra.mxu0 %v1584
      %v1868 = vpop.f32.mrf.mxu0
      %v1869 = vadd.f32 %v1456, %v1868
      %v1870 = vpop.f32.mrf.mxu0
      %v1871 = vpop.f32.mrf.mxu0
      %v1872 = vadd.f32 %v1456, %v1871
      %v1873 = vpop.f32.mrf.mxu0
      %1874 = vdwg.mxu0
      %v1875 = vmax.f32 %v1749, 0.0
      %v1876 = vmax.f32 %v1752, 0.0
      %v1877 = vmax.f32 %v1757, 0.0
      %v1878 = vmax.f32 %v1760, 0.0
      %v1879 = vmax.f32 %v1765, 0.0
      %v1880 = vmax.f32 %v1768, 0.0
      %v1881 = vmax.f32 %v1773, 0.0
      %v1882 = vmax.f32 %v1776, 0.0
      %v1883 = vmax.f32 %v1781, 0.0
      %v1884 = vmax.f32 %v1784, 0.0
      %v1885 = vmax.f32 %v1789, 0.0
      %v1886 = vmax.f32 %v1792, 0.0
      %v1887 = vmax.f32 %v1797, 0.0
      %v1888 = vmax.f32 %v1800, 0.0
      %v1889 = vmax.f32 %v1805, 0.0
      %v1890 = vmax.f32 %v1808, 0.0
      %v1891 = vmax.f32 %v1813, 0.0
      %v1892 = vmax.f32 %v1816, 0.0
      %v1893 = vmax.f32 %v1821, 0.0
      %v1894 = vmax.f32 %v1824, 0.0
      %v1895 = vmax.f32 %v1829, 0.0
      %v1896 = vmax.f32 %v1832, 0.0
      %v1897 = vmax.f32 %v1837, 0.0
      %v1898 = vmax.f32 %v1840, 0.0
      %v1899 = vmax.f32 %v1845, 0.0
      %v1900 = vmax.f32 %v1848, 0.0
      %v1901 = vmax.f32 %v1853, 0.0
      %v1902 = vmax.f32 %v1856, 0.0
      %v1903 = vmax.f32 %v1861, 0.0
      %v1904 = vmax.f32 %v1864, 0.0
      %v1905 = vmax.f32 %v1869, 0.0
      %v1906 = vmax.f32 %v1872, 0.0
      %v1907 = vld [vmem:[%s8] sm:$0x1]
      %v1909 = vlaneseq
      %v1910 = vshrl.u32 %v1909, 7
      %v1911 = vsub.s32 0, %v1910
      %v1912 = vrot.slane %v1907, %v1911
      %v1914 = vmul.f32 %v1875, %v1912
      %v1915 = vmul.f32 %v1876, %v1912
      %v1916 = vmul.f32 %v1877, %v1912
      %v1917 = vmul.f32 %v1878, %v1912
      %v1918 = vmul.f32 %v1879, %v1912
      %v1919 = vmul.f32 %v1880, %v1912
      %v1920 = vmul.f32 %v1881, %v1912
      %v1921 = vmul.f32 %v1882, %v1912
      %v1922 = vmul.f32 %v1883, %v1912
      %v1923 = vmul.f32 %v1884, %v1912
      %v1924 = vmul.f32 %v1885, %v1912
      %v1925 = vmul.f32 %v1886, %v1912
      %v1926 = vmul.f32 %v1887, %v1912
      %v1927 = vmul.f32 %v1888, %v1912
      %v1928 = vmul.f32 %v1889, %v1912
      %v1929 = vmul.f32 %v1890, %v1912
      %v1930 = vmul.f32 %v1891, %v1912
      %v1931 = vmul.f32 %v1892, %v1912
      %v1932 = vmul.f32 %v1893, %v1912
      %v1933 = vmul.f32 %v1894, %v1912
      %v1934 = vmul.f32 %v1895, %v1912
      %v1935 = vmul.f32 %v1896, %v1912
      %v1936 = vmul.f32 %v1897, %v1912
      %v1937 = vmul.f32 %v1898, %v1912
      %v1938 = vmul.f32 %v1899, %v1912
      %v1939 = vmul.f32 %v1900, %v1912
      %v1940 = vmul.f32 %v1901, %v1912
      %v1941 = vmul.f32 %v1902, %v1912
      %v1942 = vmul.f32 %v1903, %v1912
      %v1943 = vmul.f32 %v1904, %v1912
      %v1944 = vmul.f32 %v1905, %v1912
      %v1945 = vmul.f32 %v1906, %v1912
      %1946 = vadd.xlane.f32.xlu0 %v1914
      %v1947 = vpop.xlane.xlu0 %1946
      %1948 = vadd.xlane.f32.xlu0 %v1915
      %v1949 = vpop.xlane.xlu0 %1948
      %1950 = vadd.xlane.f32.xlu0 %v1916
      %v1951 = vpop.xlane.xlu0 %1950
      %1952 = vadd.xlane.f32.xlu0 %v1917
      %v1953 = vpop.xlane.xlu0 %1952
      %1954 = vadd.xlane.f32.xlu0 %v1918
      %v1955 = vpop.xlane.xlu0 %1954
      %1956 = vadd.xlane.f32.xlu0 %v1919
      %v1957 = vpop.xlane.xlu0 %1956
      %1958 = vadd.xlane.f32.xlu0 %v1920
      %v1959 = vpop.xlane.xlu0 %1958
      %1960 = vadd.xlane.f32.xlu0 %v1921
      %v1961 = vpop.xlane.xlu0 %1960
      %1962 = vadd.xlane.f32.xlu0 %v1922
      %v1963 = vpop.xlane.xlu0 %1962
      %1964 = vadd.xlane.f32.xlu0 %v1923
      %v1965 = vpop.xlane.xlu0 %1964
      %1966 = vadd.xlane.f32.xlu0 %v1924
      %v1967 = vpop.xlane.xlu0 %1966
      %1968 = vadd.xlane.f32.xlu0 %v1925
      %v1969 = vpop.xlane.xlu0 %1968
      %1970 = vadd.xlane.f32.xlu0 %v1926
      %v1971 = vpop.xlane.xlu0 %1970
      %1972 = vadd.xlane.f32.xlu0 %v1927
      %v1973 = vpop.xlane.xlu0 %1972
      %1974 = vadd.xlane.f32.xlu0 %v1928
      %v1975 = vpop.xlane.xlu0 %1974
      %1976 = vadd.xlane.f32.xlu0 %v1929
      %v1977 = vpop.xlane.xlu0 %1976
      %1978 = vadd.xlane.f32.xlu0 %v1930
      %v1979 = vpop.xlane.xlu0 %1978
      %1980 = vadd.xlane.f32.xlu0 %v1931
      %v1981 = vpop.xlane.xlu0 %1980
      %1982 = vadd.xlane.f32.xlu0 %v1932
      %v1983 = vpop.xlane.xlu0 %1982
      %1984 = vadd.xlane.f32.xlu0 %v1933
      %v1985 = vpop.xlane.xlu0 %1984
      %1986 = vadd.xlane.f32.xlu0 %v1934
      %v1987 = vpop.xlane.xlu0 %1986
      %1988 = vadd.xlane.f32.xlu0 %v1935
      %v1989 = vpop.xlane.xlu0 %1988
      %1990 = vadd.xlane.f32.xlu0 %v1936
      %v1991 = vpop.xlane.xlu0 %1990
      %1992 = vadd.xlane.f32.xlu0 %v1937
      %v1993 = vpop.xlane.xlu0 %1992
      %1994 = vadd.xlane.f32.xlu0 %v1938
      %v1995 = vpop.xlane.xlu0 %1994
      %1996 = vadd.xlane.f32.xlu0 %v1939
      %v1997 = vpop.xlane.xlu0 %1996
      %1998 = vadd.xlane.f32.xlu0 %v1940
      %v1999 = vpop.xlane.xlu0 %1998
      %2000 = vadd.xlane.f32.xlu0 %v1941
      %v2001 = vpop.xlane.xlu0 %2000
      %2002 = vadd.xlane.f32.xlu0 %v1942
      %v2003 = vpop.xlane.xlu0 %2002
      %2004 = vadd.xlane.f32.xlu0 %v1943
      %v2005 = vpop.xlane.xlu0 %2004
      %2006 = vadd.xlane.f32.xlu0 %v1944
      %v2007 = vpop.xlane.xlu0 %2006
      %2008 = vadd.xlane.f32.xlu0 %v1945
      %v2009 = vpop.xlane.xlu0 %2008
      %v2010 = vld [vmem:[#allocation3] sm:$0x1]
      %v2012 = vlaneseq
      %v2013 = vshrl.u32 %v2012, 7
      %v2014 = vsub.s32 0, %v2013
      %v2015 = vrot.slane %v2010, %v2014
      %v2017 = vadd.f32 %v1947, %v2015
      %v2018 = vadd.f32 %v1949, %v2015
      %v2019 = vadd.f32 %v1951, %v2015
      %v2020 = vadd.f32 %v1953, %v2015
      %v2021 = vadd.f32 %v1955, %v2015
      %v2022 = vadd.f32 %v1957, %v2015
      %v2023 = vadd.f32 %v1959, %v2015
      %v2024 = vadd.f32 %v1961, %v2015
      %v2025 = vadd.f32 %v1963, %v2015
      %v2026 = vadd.f32 %v1965, %v2015
      %v2027 = vadd.f32 %v1967, %v2015
      %v2028 = vadd.f32 %v1969, %v2015
      %v2029 = vadd.f32 %v1971, %v2015
      %v2030 = vadd.f32 %v1973, %v2015
      %v2031 = vadd.f32 %v1975, %v2015
      %v2032 = vadd.f32 %v1977, %v2015
      %v2033 = vadd.f32 %v1979, %v2015
      %v2034 = vadd.f32 %v1981, %v2015
      %v2035 = vadd.f32 %v1983, %v2015
      %v2036 = vadd.f32 %v1985, %v2015
      %v2037 = vadd.f32 %v1987, %v2015
      %v2038 = vadd.f32 %v1989, %v2015
      %v2039 = vadd.f32 %v1991, %v2015
      %v2040 = vadd.f32 %v1993, %v2015
      %v2041 = vadd.f32 %v1995, %v2015
      %v2042 = vadd.f32 %v1997, %v2015
      %v2043 = vadd.f32 %v1999, %v2015
      %v2044 = vadd.f32 %v2001, %v2015
      %v2045 = vadd.f32 %v2003, %v2015
      %v2046 = vadd.f32 %v2005, %v2015
      %v2047 = vadd.f32 %v2007, %v2015
      %v2048 = vadd.f32 %v2009, %v2015
      %vm2049 = vcmask 7168
      %2050 = vst.msk [vmem:[%s381] sm:$0xff] %vm2049, %v2017
      %2051 = vst.msk [vmem:[%s381 + $0x8] sm:$0xff] %vm2049, %v2018
      %2052 = vst.msk [vmem:[%s381 + $0x10] sm:$0xff] %vm2049, %v2019
      %2053 = vst.msk [vmem:[%s381 + $0x18] sm:$0xff] %vm2049, %v2020
      %2054 = vst.msk [vmem:[%s381 + $0x20] sm:$0xff] %vm2049, %v2021
      %2055 = vst.msk [vmem:[%s381 + $0x28] sm:$0xff] %vm2049, %v2022
      %2056 = vst.msk [vmem:[%s381 + $0x30] sm:$0xff] %vm2049, %v2023
      %2057 = vst.msk [vmem:[%s381 + $0x38] sm:$0xff] %vm2049, %v2024
      %2058 = vst.msk [vmem:[%s381 + $0x40] sm:$0xff] %vm2049, %v2025
      %2059 = vst.msk [vmem:[%s381 + $0x48] sm:$0xff] %vm2049, %v2026
      %2060 = vst.msk [vmem:[%s381 + $0x50] sm:$0xff] %vm2049, %v2027
      %2061 = vst.msk [vmem:[%s381 + $0x58] sm:$0xff] %vm2049, %v2028
      %2062 = vst.msk [vmem:[%s381 + $0x60] sm:$0xff] %vm2049, %v2029
      %2063 = vst.msk [vmem:[%s381 + $0x68] sm:$0xff] %vm2049, %v2030
      %2064 = vst.msk [vmem:[%s381 + $0x70] sm:$0xff] %vm2049, %v2031
      %2065 = vst.msk [vmem:[%s381 + $0x78] sm:$0xff] %vm2049, %v2032
      %2066 = vst.msk [vmem:[%s381 + $0x80] sm:$0xff] %vm2049, %v2033
      %2067 = vst.msk [vmem:[%s381 + $0x88] sm:$0xff] %vm2049, %v2034
      %2068 = vst.msk [vmem:[%s381 + $0x90] sm:$0xff] %vm2049, %v2035
      %2069 = vst.msk [vmem:[%s381 + $0x98] sm:$0xff] %vm2049, %v2036
      %2070 = vst.msk [vmem:[%s381 + $0xa0] sm:$0xff] %vm2049, %v2037
      %2071 = vst.msk [vmem:[%s381 + $0xa8] sm:$0xff] %vm2049, %v2038
      %2072 = vst.msk [vmem:[%s381 + $0xb0] sm:$0xff] %vm2049, %v2039
      %2073 = vst.msk [vmem:[%s381 + $0xb8] sm:$0xff] %vm2049, %v2040
      %2074 = vst.msk [vmem:[%s381 + $0xc0] sm:$0xff] %vm2049, %v2041
      %2075 = vst.msk [vmem:[%s381 + $0xc8] sm:$0xff] %vm2049, %v2042
      %2076 = vst.msk [vmem:[%s381 + $0xd0] sm:$0xff] %vm2049, %v2043
      %2077 = vst.msk [vmem:[%s381 + $0xd8] sm:$0xff] %vm2049, %v2044
      %2078 = vst.msk [vmem:[%s381 + $0xe0] sm:$0xff] %vm2049, %v2045
      %2079 = vst.msk [vmem:[%s381 + $0xe8] sm:$0xff] %vm2049, %v2046
      %2080 = vst.msk [vmem:[%s381 + $0xf0] sm:$0xff] %vm2049, %v2047
      %2081 = vst.msk [vmem:[%s381 + $0xf8] sm:$0xff] %vm2049, %v2048
      %p2082 = scmp.lt.s32.totalorder %s23, 1
      %s2083 = scalar_select %p2082, %s23, 1
      %s2084 = smul.addr %s2083, 32
      %s2085 = smul.addr %s2084, 8
      %s2086 = scalar_lea.vmem %s10, %s2085
      // Predicated region
      $region61: #{critic_forward.1} parent=59 // pred_check
        %p2087 = pneg %p261
      $region62: #{critic_forward.1} parent=59 // pred_check_branch
        %2089 = sbr.rel (%p2087) target = $region64
      $region63: #{critic_forward.1} parent=59 // pred_region
        _
      $region64: #{critic_forward.1} parent=59 // pred_fallthru
        _
    $region60: #{critic_forward.1} parent=5 // pred_fallthru
      _
    %p2090 = scmp.le.s32.totalorder 2, %s18
    // Predicated region
    $region65: #{critic_forward.1} parent=5 // pred_check
      %p2091 = pneg %p2090
    $region66: #{critic_forward.1} parent=5 // pred_check_branch
      %2093 = sbr.rel (%p2091) target = $region68
    $region67: #{critic_forward.1} parent=5 // pred_region
      %s2094 = ssub.s32 %s18, 2
      // Predicated region
      $region69: #{critic_forward.1} parent=67 // pred_check
        %p2095 = pneg %p267
      $region70: #{critic_forward.1} parent=67 // pred_check_branch
        %2097 = sbr.rel (%p2095) target = $region72
      $region71: #{critic_forward.1} parent=67 // pred_region
        %p2098 = scmp.lt.s32.totalorder %s24, 1
        %s2099 = scalar_select %p2098, %s24, 1
        %s2100 = smul.addr %s2099, 32
        %s2101 = smul.addr %s2100, 8
        %s2102 = scalar_lea.vmem %s10, %s2101
      $region72: #{critic_forward.1} parent=67 // pred_fallthru
        _
    $region68: #{critic_forward.1} parent=5 // pred_fallthru
      _
  $region6: #{critic_forward.1} parent=0 // loop_footer
    %s22 = sadd.s32 1, %s18
  $region7: #{critic_forward.1} parent=0 // loop_footer_branch
    %17 = sbr.rel target = $region3
  $region8: #{critic_forward.1} parent=0 // loop_exit
    _

</llo_original>
